<compile_context>
chip_gen: v6e
topology: v6e:2x2x1
jax: 0.10.0
libtpu: 0.0.40
codegen_flags: <defaults>
</compile_context>

<pallas_src>
import functools

import jax
import jax.numpy as jnp
from jax import lax
from jax.experimental import pallas as pl
from jax.experimental.pallas import tpu as pltpu


# ------------------------------ fused kernel --------------------------------

def _fused_attention_kernel(x_ref, ctx_ref, wq_ref, wkv_ref, wo_ref, bo_ref,
                            y_ref,
                            q_scr, m_scr, l_scr, acc_scr,
                            *, heads, dim_head, scale, compute_dtype):
    """One (batch, q_tile) output tile; kv tiles stream over grid axis 2."""
    kv_i = pl.program_id(2)
    inner = heads * dim_head

    # ---- init (first kv tile): q projection + online-softmax state ---------
    @pl.when(kv_i == 0)
    def _init():
        xb = x_ref[0].astype(compute_dtype)                      # (tq, qd)
        # Fold the softmax scale into q: touches tq*inner elements once
        # instead of tq*m per kv tile.
        q_scr[...] = scale * jnp.dot(
            xb, wq_ref[...].astype(compute_dtype),
            preferred_element_type=jnp.float32)                  # (tq, inner)
        m_scr[...] = jnp.full(m_scr.shape, -jnp.inf, dtype=m_scr.dtype)
        l_scr[...] = jnp.zeros(l_scr.shape, dtype=l_scr.dtype)
        acc_scr[...] = jnp.zeros(acc_scr.shape, dtype=acc_scr.dtype)

    # ---- kv projection for this context tile (fused, lane-dense) -----------
    cb = ctx_ref[0].astype(compute_dtype)                        # (tkv, cd)
    kv = jnp.dot(cb, wkv_ref[...].astype(compute_dtype),
                 preferred_element_type=jnp.float32)             # (tkv, 2*inner)

    # ---- per-head online-softmax attention (static unroll over heads) ------
    for h in range(heads):
        lo = h * dim_head
        qh = q_scr[:, lo:lo + dim_head]                          # (tq,  d)
        kh = kv[:, lo:lo + dim_head]                             # (tkv, d)
        vh = kv[:, inner + lo:inner + lo + dim_head]             # (tkv, d)

        # Contract on the last axes: no explicit k transpose materialized.
        sim = lax.dot_general(
            qh.astype(compute_dtype), kh.astype(compute_dtype),
            (((1,), (1,)), ((), ())),
            preferred_element_type=jnp.float32)                  # (tq, tkv)
        # TODO(synk): apply the optional boolean mask (masked_fill_) here.

        m_prev = m_scr[h]                                        # (tq, 1)
        m_new = jnp.maximum(m_prev, jnp.max(sim, axis=-1, keepdims=True))
        alpha = jnp.exp(m_prev - m_new)
        p = jnp.exp(sim - m_new)                                 # (tq, tkv)
        l_scr[h] = alpha * l_scr[h] + jnp.sum(p, axis=-1, keepdims=True)
        acc_scr[h] = alpha * acc_scr[h] + jnp.dot(
            p.astype(compute_dtype), vh.astype(compute_dtype),
            preferred_element_type=jnp.float32)                  # (tq, d)
        m_scr[h] = m_new

    # ---- finalize (last kv tile): normalize + fused output projection ------
    @pl.when(kv_i == pl.num_programs(2) - 1)
    def _finalize():
        tq = q_scr.shape[0]
        qd = wo_ref.shape[1]
        y = jnp.zeros((tq, qd), jnp.float32)
        for h in range(heads):
            lo = h * dim_head
            inv_l = pl.reciprocal(l_scr[h], approx=True)         # EUP slot
            oh = acc_scr[h] * inv_l                              # (tq, d)
            # out @ Wo == sum_h out_h @ Wo[h*d:(h+1)*d, :]  (head merge fused)
            y = y + jnp.dot(
                oh.astype(compute_dtype),
                wo_ref[lo:lo + dim_head, :].astype(compute_dtype),
                preferred_element_type=jnp.float32)
        y_ref[0] = (y + bo_ref[...]).astype(y_ref.dtype)


# ------------------------------ module wrapper -------------------------------

def _pick_tile(dim, target):
    """Largest divisor of `dim` that is <= target (multiple of 8 preferred)."""
    if dim <= target:
        return dim
    start = target - (target % 8)
    for t in range(start, 7, -8):
        if dim % t == 0:
            return t
    return dim


def attention_forward(x, params, *, heads, dim_head, context=None,
                      q_tile=256, kv_tile=512, compute_dtype=jnp.float32):
    """Pallas equivalent of Attention.forward (mask=None, dropout=0).

    compute_dtype=jnp.bfloat16 doubles MXU throughput on v6e/v7x (f32
    accumulation is kept); use ~1e-2 tolerances when comparing in that mode.
    """
    b, n, query_dim = x.shape
    ctx = x if context is None else context
    m, ctx_dim = ctx.shape[1], ctx.shape[2]
    inner = heads * dim_head
    scale = dim_head ** (-0.5)

    tq = _pick_tile(n, q_tile)
    tkv = _pick_tile(m, kv_tile)
    grid = (b, n // tq, m // tkv)

    bo = params["bo"].reshape(1, query_dim)

    kernel = functools.partial(
        _fused_attention_kernel, heads=heads, dim_head=dim_head,
        scale=scale, compute_dtype=compute_dtype)

    flops = 2 * b * (n * query_dim * inner              # q projection
                     + m * ctx_dim * 2 * inner          # kv projection
                     + 2 * heads * n * m * dim_head     # qk^T and p@v
                     + n * inner * query_dim)           # output projection
    bytes_accessed = 4 * (int(x.size) + int(ctx.size)
                          + int(params["wq"].size) + int(params["wkv"].size)
                          + int(params["wo"].size) + int(params["bo"].size)
                          + b * n * query_dim)
    cost = pl.CostEstimate(flops=flops,
                           transcendentals=b * heads * n * m,
                           bytes_accessed=bytes_accessed)

    return pl.pallas_call(
        kernel,
        out_shape=jax.ShapeDtypeStruct((b, n, query_dim), x.dtype),
        grid=grid,
        in_specs=[
            pl.BlockSpec((1, tq, query_dim), lambda bi, qi, ki: (bi, qi, 0)),
            pl.BlockSpec((1, tkv, ctx_dim), lambda bi, qi, ki: (bi, ki, 0)),
            pl.BlockSpec((query_dim, inner), lambda bi, qi, ki: (0, 0)),
            pl.BlockSpec((ctx_dim, 2 * inner), lambda bi, qi, ki: (0, 0)),
            pl.BlockSpec((inner, query_dim), lambda bi, qi, ki: (0, 0)),
            pl.BlockSpec((1, query_dim), lambda bi, qi, ki: (0, 0)),
        ],
        out_specs=pl.BlockSpec((1, tq, query_dim),
                               lambda bi, qi, ki: (bi, qi, 0)),
        scratch_shapes=[
            pltpu.VMEM((tq, inner), jnp.float32),            # scaled q
            pltpu.VMEM((heads, tq, 1), jnp.float32),         # running max
            pltpu.VMEM((heads, tq, 1), jnp.float32),         # running sum
            pltpu.VMEM((heads, tq, dim_head), jnp.float32),  # unnormalized out
        ],
        compiler_params=pltpu.CompilerParams(
            dimension_semantics=("parallel", "parallel", "arbitrary"),
            vmem_limit_bytes=32 * 1024 * 1024),
        cost_estimate=cost,
    )(x, ctx, params["wq"], params["wkv"], params["wo"], bo)


# ------------------------------- reference -----------------------------------

def attention_reference(x, params, *, heads, dim_head, context=None):
    b, n, query_dim = x.shape
    context = x if context is None else context
    m = context.shape[1]
    inner = heads * dim_head
    scale = dim_head ** (-0.5)
    q = x.reshape(b * n, -1) @ params["wq"]
    kv = context.reshape(b * m, -1) @ params["wkv"]
    k, v = kv[:, :inner], kv[:, inner:]

    def split(t, seq):
        return (t.reshape(b, seq, heads, dim_head)
                 .transpose(0, 2, 1, 3).reshape(b * heads, seq, dim_head))

    qh, kh, vh = split(q, n), split(k, m), split(v, m)
    sim = jnp.einsum("bid,bjd->bij", qh, kh) * scale
    attn = jax.nn.softmax(sim, axis=-1)
    out = jnp.einsum("bij,bjd->bid", attn, vh)
    out = (out.reshape(b, heads, n, dim_head)
              .transpose(0, 2, 1, 3).reshape(b * n, inner))
    y = out @ params["wo"] + params["bo"]
    return y.reshape(b, n, query_dim)


# --------------------------------- main ---------------------------------------

if __name__ == "__main__":
    # small shapes consistent with the module
    b, n = 2, 8
    query_dim = 32
    heads, dim_head = 4, 16
    inner = heads * dim_head

    key = jax.random.PRNGKey(0)
    kx, kq, kkv, kwo, kbo = jax.random.split(key, 5)

    x = jax.random.normal(kx, (b, n, query_dim), dtype=jnp.float32)

    # deterministic synthetic parameters (PyTorch weight shapes, pre-transposed
    # to (in_dim, out_dim) so every matmul is y = x @ W)
    params = {
        # to_q:  nn.Linear(query_dim, inner, bias=False)  -> W^T: (query_dim, inner)
        "wq": 0.05 * jax.random.normal(kq, (query_dim, inner), dtype=jnp.float32),
        # to_kv: nn.Linear(query_dim, 2*inner, bias=False) -> W^T: (query_dim, 2*inner)
        "wkv": 0.05 * jax.random.normal(kkv, (query_dim, 2 * inner), dtype=jnp.float32),
        # to_out: nn.Linear(inner, query_dim)              -> W^T: (inner, query_dim)
        "wo": 0.05 * jax.random.normal(kwo, (inner, query_dim), dtype=jnp.float32),
        "bo": 0.01 * jax.random.normal(kbo, (query_dim,), dtype=jnp.float32),
    }

    y = attention_forward(x, params, heads=heads, dim_head=dim_head)
    y = jax.block_until_ready(y)

    y_ref = attention_reference(x, params, heads=heads, dim_head=dim_head)
    assert y.shape == (b, n, query_dim)
    # 1e-3 tolerance: exact-f32 matmuls, only the approx reciprocal on the EUP
    # and the online-softmax reassociation differ from the plain reference.
    assert jnp.allclose(y, y_ref, atol=1e-3, rtol=1e-3), "mismatch vs reference"

    print("KERNEL_OK")
</pallas_src>

<mosaic_0001>
module attributes {stable_mosaic.version = 11 : i64} {
  func.func @_fused_attention_kernel(%arg0: i32, %arg1: i32, %arg2: i32, %arg3: memref<1x8x32xf32, #tpu.memory_space<vmem>>, %arg4: memref<1x8x32xf32, #tpu.memory_space<vmem>>, %arg5: memref<32x64xf32, #tpu.memory_space<vmem>>, %arg6: memref<32x128xf32, #tpu.memory_space<vmem>>, %arg7: memref<64x32xf32, #tpu.memory_space<vmem>>, %arg8: memref<1x32xf32, #tpu.memory_space<vmem>>, %arg9: memref<1x8x32xf32, #tpu.memory_space<vmem>>, %arg10: memref<8x64xf32, #tpu.memory_space<vmem>>, %arg11: memref<4x8x1xf32, #tpu.memory_space<vmem>>, %arg12: memref<4x8x1xf32, #tpu.memory_space<vmem>>, %arg13: memref<4x8x16xf32, #tpu.memory_space<vmem>>) attributes {dimension_semantics = [#tpu.dimension_semantics<parallel>, #tpu.dimension_semantics<parallel>, #tpu.dimension_semantics<arbitrary>], iteration_bounds = array<i64: 2, 1, 1>, scalar_prefetch = 0 : i64, scratch_operands = 4 : i64, tpu.core_type = #tpu.core_type<tc>, window_params = [{transform_indices = @transform_0, window_bounds = array<i64: 1, 8, 32>}, {transform_indices = @transform_1, window_bounds = array<i64: 1, 8, 32>}, {pipeline_mode = #tpu.pipeline_mode<synchronous>, transform_indices = @transform_2, window_bounds = array<i64: 32, 64>}, {pipeline_mode = #tpu.pipeline_mode<synchronous>, transform_indices = @transform_3, window_bounds = array<i64: 32, 128>}, {pipeline_mode = #tpu.pipeline_mode<synchronous>, transform_indices = @transform_4, window_bounds = array<i64: 64, 32>}, {pipeline_mode = #tpu.pipeline_mode<synchronous>, transform_indices = @transform_5, window_bounds = array<i64: 1, 32>}, {transform_indices = @transform_6, window_bounds = array<i64: 1, 8, 32>}]} {
    %c0_i32 = arith.constant 0 : i32
    %0 = arith.cmpi eq, %arg2, %c0_i32 : i32
    %1 = arith.extui %0 : i1 to i32
    %c0_i32_0 = arith.constant 0 : i32
    %2 = arith.cmpi ne, %1, %c0_i32_0 : i32
    scf.if %2 {
      %c0_97 = arith.constant 0 : index
      %c0_98 = arith.constant 0 : index
      %c0_99 = arith.constant 0 : index
      %150 = vector.load %arg3[%c0_97, %c0_98, %c0_99] : memref<1x8x32xf32, #tpu.memory_space<vmem>>, vector<1x8x32xf32>
      %151 = vector.shape_cast %150 : vector<1x8x32xf32> to vector<8x32xf32>
      %c0_100 = arith.constant 0 : index
      %c0_101 = arith.constant 0 : index
      %152 = vector.load %arg5[%c0_100, %c0_101] : memref<32x64xf32, #tpu.memory_space<vmem>>, vector<32x64xf32>
      %cst_102 = arith.constant dense<0.000000e+00> : vector<8x64xf32>
      %153 = tpu.matmul %151, %152, %cst_102 {dimension_numbers = #tpu.dot_dimension_numbers<[1], [0], [0], [1], [0, 0, 1, 1], [], []>} : vector<8x32xf32>, vector<32x64xf32>, vector<8x64xf32> -> vector<8x64xf32>
      %cst_103 = arith.constant 2.500000e-01 : f32
      %154 = vector.broadcast %cst_103 : f32 to vector<8x64xf32>
      %155 = arith.mulf %154, %153 : vector<8x64xf32>
      %c0_104 = arith.constant 0 : index
      %c0_105 = arith.constant 0 : index
      %156 = vector.load %arg10[%c0_104, %c0_105] : memref<8x64xf32, #tpu.memory_space<vmem>>, vector<8x64xf32>
      tpu.vector_store %arg10[%c0_104, %c0_105], %155 {strides = array<i32>} : memref<8x64xf32, #tpu.memory_space<vmem>>, vector<8x64xf32>,
      %cst_106 = arith.constant 0xFF800000 : f32
      %157 = vector.broadcast %cst_106 : f32 to vector<4x8x1xf32>
      %c0_107 = arith.constant 0 : index
      %c0_108 = arith.constant 0 : index
      %c0_109 = arith.constant 0 : index
      %158 = vector.load %arg11[%c0_107, %c0_108, %c0_109] : memref<4x8x1xf32, #tpu.memory_space<vmem>>, vector<4x8x1xf32>
      tpu.vector_store %arg11[%c0_107, %c0_108, %c0_109], %157 {strides = array<i32>} : memref<4x8x1xf32, #tpu.memory_space<vmem>>, vector<4x8x1xf32>,
      %cst_110 = arith.constant 0.000000e+00 : f32
      %159 = vector.broadcast %cst_110 : f32 to vector<4x8x1xf32>
      %c0_111 = arith.constant 0 : index
      %c0_112 = arith.constant 0 : index
      %c0_113 = arith.constant 0 : index
      %160 = vector.load %arg12[%c0_111, %c0_112, %c0_113] : memref<4x8x1xf32, #tpu.memory_space<vmem>>, vector<4x8x1xf32>
      tpu.vector_store %arg12[%c0_111, %c0_112, %c0_113], %159 {strides = array<i32>} : memref<4x8x1xf32, #tpu.memory_space<vmem>>, vector<4x8x1xf32>,
      %cst_114 = arith.constant 0.000000e+00 : f32
      %161 = vector.broadcast %cst_114 : f32 to vector<4x8x16xf32>
      %c0_115 = arith.constant 0 : index
      %c0_116 = arith.constant 0 : index
      %c0_117 = arith.constant 0 : index
      %162 = vector.load %arg13[%c0_115, %c0_116, %c0_117] : memref<4x8x16xf32, #tpu.memory_space<vmem>>, vector<4x8x16xf32>
      tpu.vector_store %arg13[%c0_115, %c0_116, %c0_117], %161 {strides = array<i32>} : memref<4x8x16xf32, #tpu.memory_space<vmem>>, vector<4x8x16xf32>,
    } else {
    }
    %c0 = arith.constant 0 : index
    %c0_1 = arith.constant 0 : index
    %c0_2 = arith.constant 0 : index
    %3 = vector.load %arg4[%c0, %c0_1, %c0_2] : memref<1x8x32xf32, #tpu.memory_space<vmem>>, vector<1x8x32xf32>
    %4 = vector.shape_cast %3 : vector<1x8x32xf32> to vector<8x32xf32>
    %c0_3 = arith.constant 0 : index
    %c0_4 = arith.constant 0 : index
    %5 = vector.load %arg6[%c0_3, %c0_4] : memref<32x128xf32, #tpu.memory_space<vmem>>, vector<32x128xf32>
    %cst = arith.constant dense<0.000000e+00> : vector<8x128xf32>
    %6 = tpu.matmul %4, %5, %cst {dimension_numbers = #tpu.dot_dimension_numbers<[1], [0], [0], [1], [0, 0, 1, 1], [], []>} : vector<8x32xf32>, vector<32x128xf32>, vector<8x128xf32> -> vector<8x128xf32>
    %c0_5 = arith.constant 0 : index
    %c0_6 = arith.constant 0 : index
    %7 = vector.load %arg10[%c0_5, %c0_6] : memref<8x64xf32, #tpu.memory_space<vmem>>, vector<8x16xf32>
    %8 = vector.extract_strided_slice %6 {offsets = [0, 0], sizes = [8, 16], strides = [1, 1]} : vector<8x128xf32> to vector<8x16xf32>
    %9 = vector.extract_strided_slice %6 {offsets = [0, 64], sizes = [8, 16], strides = [1, 1]} : vector<8x128xf32> to vector<8x16xf32>
    %cst_7 = arith.constant dense<0.000000e+00> : vector<8x8xf32>
    %10 = tpu.matmul %7, %8, %cst_7 {dimension_numbers = #tpu.dot_dimension_numbers<[1], [1], [0], [0], [0, 0, 1, 0], [], []>} : vector<8x16xf32>, vector<8x16xf32>, vector<8x8xf32> -> vector<8x8xf32>
    %c0_8 = arith.constant 0 : index
    %c0_9 = arith.constant 0 : index
    %c0_10 = arith.constant 0 : index
    %11 = vector.load %arg11[%c0_8, %c0_9, %c0_10] : memref<4x8x1xf32, #tpu.memory_space<vmem>>, vector<1x8x1xf32>
    %12 = vector.shape_cast %11 : vector<1x8x1xf32> to vector<8x1xf32>
    %cst_11 = arith.constant dense<0xFF800000> : vector<8xf32>
    %13 = vector.multi_reduction <maximumf>, %10, %cst_11 [1] : vector<8x8xf32> to vector<8xf32>
    %14 = vector.shape_cast %13 : vector<8xf32> to vector<8x1xf32>
    %15 = arith.maximumf %12, %14 : vector<8x1xf32>
    %16 = arith.subf %12, %15 : vector<8x1xf32>
    %17 = math.exp %16 : vector<8x1xf32>
    %18 = vector.broadcast %15 : vector<8x1xf32> to vector<8x8xf32>
    %19 = arith.subf %10, %18 : vector<8x8xf32>
    %20 = math.exp %19 : vector<8x8xf32>
    %c0_12 = arith.constant 0 : index
    %c0_13 = arith.constant 0 : index
    %c0_14 = arith.constant 0 : index
    %21 = vector.load %arg12[%c0_12, %c0_13, %c0_14] : memref<4x8x1xf32, #tpu.memory_space<vmem>>, vector<1x8x1xf32>
    %22 = vector.shape_cast %21 : vector<1x8x1xf32> to vector<8x1xf32>
    %23 = arith.mulf %17, %22 : vector<8x1xf32>
    %cst_15 = arith.constant dense<0.000000e+00> : vector<8xf32>
    %24 = vector.multi_reduction <add>, %20, %cst_15 [1] : vector<8x8xf32> to vector<8xf32>
    %25 = vector.shape_cast %24 : vector<8xf32> to vector<8x1xf32>
    %26 = arith.addf %23, %25 : vector<8x1xf32>
    %c0_16 = arith.constant 0 : index
    %c0_17 = arith.constant 0 : index
    %c0_18 = arith.constant 0 : index
    %27 = vector.load %arg12[%c0_16, %c0_17, %c0_18] : memref<4x8x1xf32, #tpu.memory_space<vmem>>, vector<1x8x1xf32>
    %28 = vector.shape_cast %27 : vector<1x8x1xf32> to vector<8x1xf32>
    %29 = vector.shape_cast %26 : vector<8x1xf32> to vector<1x8x1xf32>
    tpu.vector_store %arg12[%c0_16, %c0_17, %c0_18], %29 {strides = array<i32>} : memref<4x8x1xf32, #tpu.memory_space<vmem>>, vector<1x8x1xf32>,
    %c0_19 = arith.constant 0 : index
    %c0_20 = arith.constant 0 : index
    %c0_21 = arith.constant 0 : index
    %30 = vector.load %arg13[%c0_19, %c0_20, %c0_21] : memref<4x8x16xf32, #tpu.memory_space<vmem>>, vector<1x8x16xf32>
    %31 = vector.shape_cast %30 : vector<1x8x16xf32> to vector<8x16xf32>
    %32 = vector.broadcast %17 : vector<8x1xf32> to vector<8x16xf32>
    %33 = arith.mulf %32, %31 : vector<8x16xf32>
    %cst_22 = arith.constant dense<0.000000e+00> : vector<8x16xf32>
    %34 = tpu.matmul %20, %9, %cst_22 {dimension_numbers = #tpu.dot_dimension_numbers<[1], [0], [0], [1], [0, 0, 1, 1], [], []>} : vector<8x8xf32>, vector<8x16xf32>, vector<8x16xf32> -> vector<8x16xf32>
    %35 = arith.addf %33, %34 : vector<8x16xf32>
    %c0_23 = arith.constant 0 : index
    %c0_24 = arith.constant 0 : index
    %c0_25 = arith.constant 0 : index
    %36 = vector.load %arg13[%c0_23, %c0_24, %c0_25] : memref<4x8x16xf32, #tpu.memory_space<vmem>>, vector<1x8x16xf32>
    %37 = vector.shape_cast %36 : vector<1x8x16xf32> to vector<8x16xf32>
    %38 = vector.shape_cast %35 : vector<8x16xf32> to vector<1x8x16xf32>
    tpu.vector_store %arg13[%c0_23, %c0_24, %c0_25], %38 {strides = array<i32>} : memref<4x8x16xf32, #tpu.memory_space<vmem>>, vector<1x8x16xf32>,
    %c0_26 = arith.constant 0 : index
    %c0_27 = arith.constant 0 : index
    %c0_28 = arith.constant 0 : index
    %39 = vector.load %arg11[%c0_26, %c0_27, %c0_28] : memref<4x8x1xf32, #tpu.memory_space<vmem>>, vector<1x8x1xf32>
    %40 = vector.shape_cast %39 : vector<1x8x1xf32> to vector<8x1xf32>
    %41 = vector.shape_cast %15 : vector<8x1xf32> to vector<1x8x1xf32>
    tpu.vector_store %arg11[%c0_26, %c0_27, %c0_28], %41 {strides = array<i32>} : memref<4x8x1xf32, #tpu.memory_space<vmem>>, vector<1x8x1xf32>,
    %c0_29 = arith.constant 0 : index
    %c16 = arith.constant 16 : index
    %42 = vector.load %arg10[%c0_29, %c16] : memref<8x64xf32, #tpu.memory_space<vmem>>, vector<8x16xf32>
    %43 = vector.extract_strided_slice %6 {offsets = [0, 16], sizes = [8, 16], strides = [1, 1]} : vector<8x128xf32> to vector<8x16xf32>
    %44 = vector.extract_strided_slice %6 {offsets = [0, 80], sizes = [8, 16], strides = [1, 1]} : vector<8x128xf32> to vector<8x16xf32>
    %cst_30 = arith.constant dense<0.000000e+00> : vector<8x8xf32>
    %45 = tpu.matmul %42, %43, %cst_30 {dimension_numbers = #tpu.dot_dimension_numbers<[1], [1], [0], [0], [0, 0, 1, 0], [], []>} : vector<8x16xf32>, vector<8x16xf32>, vector<8x8xf32> -> vector<8x8xf32>
    %c1 = arith.constant 1 : index
    %c0_31 = arith.constant 0 : index
    %c0_32 = arith.constant 0 : index
    %46 = vector.load %arg11[%c1, %c0_31, %c0_32] : memref<4x8x1xf32, #tpu.memory_space<vmem>>, vector<1x8x1xf32>
    %47 = vector.shape_cast %46 : vector<1x8x1xf32> to vector<8x1xf32>
    %cst_33 = arith.constant dense<0xFF800000> : vector<8xf32>
    %48 = vector.multi_reduction <maximumf>, %45, %cst_33 [1] : vector<8x8xf32> to vector<8xf32>
    %49 = vector.shape_cast %48 : vector<8xf32> to vector<8x1xf32>
    %50 = arith.maximumf %47, %49 : vector<8x1xf32>
    %51 = arith.subf %47, %50 : vector<8x1xf32>
    %52 = math.exp %51 : vector<8x1xf32>
    %53 = vector.broadcast %50 : vector<8x1xf32> to vector<8x8xf32>
    %54 = arith.subf %45, %53 : vector<8x8xf32>
    %55 = math.exp %54 : vector<8x8xf32>
    %c1_34 = arith.constant 1 : index
    %c0_35 = arith.constant 0 : index
    %c0_36 = arith.constant 0 : index
    %56 = vector.load %arg12[%c1_34, %c0_35, %c0_36] : memref<4x8x1xf32, #tpu.memory_space<vmem>>, vector<1x8x1xf32>
    %57 = vector.shape_cast %56 : vector<1x8x1xf32> to vector<8x1xf32>
    %58 = arith.mulf %52, %57 : vector<8x1xf32>
    %cst_37 = arith.constant dense<0.000000e+00> : vector<8xf32>
    %59 = vector.multi_reduction <add>, %55, %cst_37 [1] : vector<8x8xf32> to vector<8xf32>
    %60 = vector.shape_cast %59 : vector<8xf32> to vector<8x1xf32>
    %61 = arith.addf %58, %60 : vector<8x1xf32>
    %c1_38 = arith.constant 1 : index
    %c0_39 = arith.constant 0 : index
    %c0_40 = arith.constant 0 : index
    %62 = vector.load %arg12[%c1_38, %c0_39, %c0_40] : memref<4x8x1xf32, #tpu.memory_space<vmem>>, vector<1x8x1xf32>
    %63 = vector.shape_cast %62 : vector<1x8x1xf32> to vector<8x1xf32>
    %64 = vector.shape_cast %61 : vector<8x1xf32> to vector<1x8x1xf32>
    tpu.vector_store %arg12[%c1_38, %c0_39, %c0_40], %64 {strides = array<i32>} : memref<4x8x1xf32, #tpu.memory_space<vmem>>, vector<1x8x1xf32>,
    %c1_41 = arith.constant 1 : index
    %c0_42 = arith.constant 0 : index
    %c0_43 = arith.constant 0 : index
    %65 = vector.load %arg13[%c1_41, %c0_42, %c0_43] : memref<4x8x16xf32, #tpu.memory_space<vmem>>, vector<1x8x16xf32>
    %66 = vector.shape_cast %65 : vector<1x8x16xf32> to vector<8x16xf32>
    %67 = vector.broadcast %52 : vector<8x1xf32> to vector<8x16xf32>
    %68 = arith.mulf %67, %66 : vector<8x16xf32>
    %cst_44 = arith.constant dense<0.000000e+00> : vector<8x16xf32>
    %69 = tpu.matmul %55, %44, %cst_44 {dimension_numbers = #tpu.dot_dimension_numbers<[1], [0], [0], [1], [0, 0, 1, 1], [], []>} : vector<8x8xf32>, vector<8x16xf32>, vector<8x16xf32> -> vector<8x16xf32>
    %70 = arith.addf %68, %69 : vector<8x16xf32>
    %c1_45 = arith.constant 1 : index
    %c0_46 = arith.constant 0 : index
    %c0_47 = arith.constant 0 : index
    %71 = vector.load %arg13[%c1_45, %c0_46, %c0_47] : memref<4x8x16xf32, #tpu.memory_space<vmem>>, vector<1x8x16xf32>
    %72 = vector.shape_cast %71 : vector<1x8x16xf32> to vector<8x16xf32>
    %73 = vector.shape_cast %70 : vector<8x16xf32> to vector<1x8x16xf32>
    tpu.vector_store %arg13[%c1_45, %c0_46, %c0_47], %73 {strides = array<i32>} : memref<4x8x16xf32, #tpu.memory_space<vmem>>, vector<1x8x16xf32>,
    %c1_48 = arith.constant 1 : index
    %c0_49 = arith.constant 0 : index
    %c0_50 = arith.constant 0 : index
    %74 = vector.load %arg11[%c1_48, %c0_49, %c0_50] : memref<4x8x1xf32, #tpu.memory_space<vmem>>, vector<1x8x1xf32>
    %75 = vector.shape_cast %74 : vector<1x8x1xf32> to vector<8x1xf32>
    %76 = vector.shape_cast %50 : vector<8x1xf32> to vector<1x8x1xf32>
    tpu.vector_store %arg11[%c1_48, %c0_49, %c0_50], %76 {strides = array<i32>} : memref<4x8x1xf32, #tpu.memory_space<vmem>>, vector<1x8x1xf32>,
    %c0_51 = arith.constant 0 : index
    %c32 = arith.constant 32 : index
    %77 = vector.load %arg10[%c0_51, %c32] : memref<8x64xf32, #tpu.memory_space<vmem>>, vector<8x16xf32>
    %78 = vector.extract_strided_slice %6 {offsets = [0, 32], sizes = [8, 16], strides = [1, 1]} : vector<8x128xf32> to vector<8x16xf32>
    %79 = vector.extract_strided_slice %6 {offsets = [0, 96], sizes = [8, 16], strides = [1, 1]} : vector<8x128xf32> to vector<8x16xf32>
    %cst_52 = arith.constant dense<0.000000e+00> : vector<8x8xf32>
    %80 = tpu.matmul %77, %78, %cst_52 {dimension_numbers = #tpu.dot_dimension_numbers<[1], [1], [0], [0], [0, 0, 1, 0], [], []>} : vector<8x16xf32>, vector<8x16xf32>, vector<8x8xf32> -> vector<8x8xf32>
    %c2 = arith.constant 2 : index
    %c0_53 = arith.constant 0 : index
    %c0_54 = arith.constant 0 : index
    %81 = vector.load %arg11[%c2, %c0_53, %c0_54] : memref<4x8x1xf32, #tpu.memory_space<vmem>>, vector<1x8x1xf32>
    %82 = vector.shape_cast %81 : vector<1x8x1xf32> to vector<8x1xf32>
    %cst_55 = arith.constant dense<0xFF800000> : vector<8xf32>
    %83 = vector.multi_reduction <maximumf>, %80, %cst_55 [1] : vector<8x8xf32> to vector<8xf32>
    %84 = vector.shape_cast %83 : vector<8xf32> to vector<8x1xf32>
    %85 = arith.maximumf %82, %84 : vector<8x1xf32>
    %86 = arith.subf %82, %85 : vector<8x1xf32>
    %87 = math.exp %86 : vector<8x1xf32>
    %88 = vector.broadcast %85 : vector<8x1xf32> to vector<8x8xf32>
    %89 = arith.subf %80, %88 : vector<8x8xf32>
    %90 = math.exp %89 : vector<8x8xf32>
    %c2_56 = arith.constant 2 : index
    %c0_57 = arith.constant 0 : index
    %c0_58 = arith.constant 0 : index
    %91 = vector.load %arg12[%c2_56, %c0_57, %c0_58] : memref<4x8x1xf32, #tpu.memory_space<vmem>>, vector<1x8x1xf32>
    %92 = vector.shape_cast %91 : vector<1x8x1xf32> to vector<8x1xf32>
    %93 = arith.mulf %87, %92 : vector<8x1xf32>
    %cst_59 = arith.constant dense<0.000000e+00> : vector<8xf32>
    %94 = vector.multi_reduction <add>, %90, %cst_59 [1] : vector<8x8xf32> to vector<8xf32>
    %95 = vector.shape_cast %94 : vector<8xf32> to vector<8x1xf32>
    %96 = arith.addf %93, %95 : vector<8x1xf32>
    %c2_60 = arith.constant 2 : index
    %c0_61 = arith.constant 0 : index
    %c0_62 = arith.constant 0 : index
    %97 = vector.load %arg12[%c2_60, %c0_61, %c0_62] : memref<4x8x1xf32, #tpu.memory_space<vmem>>, vector<1x8x1xf32>
    %98 = vector.shape_cast %97 : vector<1x8x1xf32> to vector<8x1xf32>
    %99 = vector.shape_cast %96 : vector<8x1xf32> to vector<1x8x1xf32>
    tpu.vector_store %arg12[%c2_60, %c0_61, %c0_62], %99 {strides = array<i32>} : memref<4x8x1xf32, #tpu.memory_space<vmem>>, vector<1x8x1xf32>,
    %c2_63 = arith.constant 2 : index
    %c0_64 = arith.constant 0 : index
    %c0_65 = arith.constant 0 : index
    %100 = vector.load %arg13[%c2_63, %c0_64, %c0_65] : memref<4x8x16xf32, #tpu.memory_space<vmem>>, vector<1x8x16xf32>
    %101 = vector.shape_cast %100 : vector<1x8x16xf32> to vector<8x16xf32>
    %102 = vector.broadcast %87 : vector<8x1xf32> to vector<8x16xf32>
    %103 = arith.mulf %102, %101 : vector<8x16xf32>
    %cst_66 = arith.constant dense<0.000000e+00> : vector<8x16xf32>
    %104 = tpu.matmul %90, %79, %cst_66 {dimension_numbers = #tpu.dot_dimension_numbers<[1], [0], [0], [1], [0, 0, 1, 1], [], []>} : vector<8x8xf32>, vector<8x16xf32>, vector<8x16xf32> -> vector<8x16xf32>
    %105 = arith.addf %103, %104 : vector<8x16xf32>
    %c2_67 = arith.constant 2 : index
    %c0_68 = arith.constant 0 : index
    %c0_69 = arith.constant 0 : index
    %106 = vector.load %arg13[%c2_67, %c0_68, %c0_69] : memref<4x8x16xf32, #tpu.memory_space<vmem>>, vector<1x8x16xf32>
    %107 = vector.shape_cast %106 : vector<1x8x16xf32> to vector<8x16xf32>
    %108 = vector.shape_cast %105 : vector<8x16xf32> to vector<1x8x16xf32>
    tpu.vector_store %arg13[%c2_67, %c0_68, %c0_69], %108 {strides = array<i32>} : memref<4x8x16xf32, #tpu.memory_space<vmem>>, vector<1x8x16xf32>,
    %c2_70 = arith.constant 2 : index
    %c0_71 = arith.constant 0 : index
    %c0_72 = arith.constant 0 : index
    %109 = vector.load %arg11[%c2_70, %c0_71, %c0_72] : memref<4x8x1xf32, #tpu.memory_space<vmem>>, vector<1x8x1xf32>
    %110 = vector.shape_cast %109 : vector<1x8x1xf32> to vector<8x1xf32>
    %111 = vector.shape_cast %85 : vector<8x1xf32> to vector<1x8x1xf32>
    tpu.vector_store %arg11[%c2_70, %c0_71, %c0_72], %111 {strides = array<i32>} : memref<4x8x1xf32, #tpu.memory_space<vmem>>, vector<1x8x1xf32>,
    %c0_73 = arith.constant 0 : index
    %c48 = arith.constant 48 : index
    %112 = vector.load %arg10[%c0_73, %c48] : memref<8x64xf32, #tpu.memory_space<vmem>>, vector<8x16xf32>
    %113 = vector.extract_strided_slice %6 {offsets = [0, 48], sizes = [8, 16], strides = [1, 1]} : vector<8x128xf32> to vector<8x16xf32>
    %114 = vector.extract_strided_slice %6 {offsets = [0, 112], sizes = [8, 16], strides = [1, 1]} : vector<8x128xf32> to vector<8x16xf32>
    %cst_74 = arith.constant dense<0.000000e+00> : vector<8x8xf32>
    %115 = tpu.matmul %112, %113, %cst_74 {dimension_numbers = #tpu.dot_dimension_numbers<[1], [1], [0], [0], [0, 0, 1, 0], [], []>} : vector<8x16xf32>, vector<8x16xf32>, vector<8x8xf32> -> vector<8x8xf32>
    %c3 = arith.constant 3 : index
    %c0_75 = arith.constant 0 : index
    %c0_76 = arith.constant 0 : index
    %116 = vector.load %arg11[%c3, %c0_75, %c0_76] : memref<4x8x1xf32, #tpu.memory_space<vmem>>, vector<1x8x1xf32>
    %117 = vector.shape_cast %116 : vector<1x8x1xf32> to vector<8x1xf32>
    %cst_77 = arith.constant dense<0xFF800000> : vector<8xf32>
    %118 = vector.multi_reduction <maximumf>, %115, %cst_77 [1] : vector<8x8xf32> to vector<8xf32>
    %119 = vector.shape_cast %118 : vector<8xf32> to vector<8x1xf32>
    %120 = arith.maximumf %117, %119 : vector<8x1xf32>
    %121 = arith.subf %117, %120 : vector<8x1xf32>
    %122 = math.exp %121 : vector<8x1xf32>
    %123 = vector.broadcast %120 : vector<8x1xf32> to vector<8x8xf32>
    %124 = arith.subf %115, %123 : vector<8x8xf32>
    %125 = math.exp %124 : vector<8x8xf32>
    %c3_78 = arith.constant 3 : index
    %c0_79 = arith.constant 0 : index
    %c0_80 = arith.constant 0 : index
    %126 = vector.load %arg12[%c3_78, %c0_79, %c0_80] : memref<4x8x1xf32, #tpu.memory_space<vmem>>, vector<1x8x1xf32>
    %127 = vector.shape_cast %126 : vector<1x8x1xf32> to vector<8x1xf32>
    %128 = arith.mulf %122, %127 : vector<8x1xf32>
    %cst_81 = arith.constant dense<0.000000e+00> : vector<8xf32>
    %129 = vector.multi_reduction <add>, %125, %cst_81 [1] : vector<8x8xf32> to vector<8xf32>
    %130 = vector.shape_cast %129 : vector<8xf32> to vector<8x1xf32>
    %131 = arith.addf %128, %130 : vector<8x1xf32>
    %c3_82 = arith.constant 3 : index
    %c0_83 = arith.constant 0 : index
    %c0_84 = arith.constant 0 : index
    %132 = vector.load %arg12[%c3_82, %c0_83, %c0_84] : memref<4x8x1xf32, #tpu.memory_space<vmem>>, vector<1x8x1xf32>
    %133 = vector.shape_cast %132 : vector<1x8x1xf32> to vector<8x1xf32>
    %134 = vector.shape_cast %131 : vector<8x1xf32> to vector<1x8x1xf32>
    tpu.vector_store %arg12[%c3_82, %c0_83, %c0_84], %134 {strides = array<i32>} : memref<4x8x1xf32, #tpu.memory_space<vmem>>, vector<1x8x1xf32>,
    %c3_85 = arith.constant 3 : index
    %c0_86 = arith.constant 0 : index
    %c0_87 = arith.constant 0 : index
    %135 = vector.load %arg13[%c3_85, %c0_86, %c0_87] : memref<4x8x16xf32, #tpu.memory_space<vmem>>, vector<1x8x16xf32>
    %136 = vector.shape_cast %135 : vector<1x8x16xf32> to vector<8x16xf32>
    %137 = vector.broadcast %122 : vector<8x1xf32> to vector<8x16xf32>
    %138 = arith.mulf %137, %136 : vector<8x16xf32>
    %cst_88 = arith.constant dense<0.000000e+00> : vector<8x16xf32>
    %139 = tpu.matmul %125, %114, %cst_88 {dimension_numbers = #tpu.dot_dimension_numbers<[1], [0], [0], [1], [0, 0, 1, 1], [], []>} : vector<8x8xf32>, vector<8x16xf32>, vector<8x16xf32> -> vector<8x16xf32>
    %140 = arith.addf %138, %139 : vector<8x16xf32>
    %c3_89 = arith.constant 3 : index
    %c0_90 = arith.constant 0 : index
    %c0_91 = arith.constant 0 : index
    %141 = vector.load %arg13[%c3_89, %c0_90, %c0_91] : memref<4x8x16xf32, #tpu.memory_space<vmem>>, vector<1x8x16xf32>
    %142 = vector.shape_cast %141 : vector<1x8x16xf32> to vector<8x16xf32>
    %143 = vector.shape_cast %140 : vector<8x16xf32> to vector<1x8x16xf32>
    tpu.vector_store %arg13[%c3_89, %c0_90, %c0_91], %143 {strides = array<i32>} : memref<4x8x16xf32, #tpu.memory_space<vmem>>, vector<1x8x16xf32>,
    %c3_92 = arith.constant 3 : index
    %c0_93 = arith.constant 0 : index
    %c0_94 = arith.constant 0 : index
    %144 = vector.load %arg11[%c3_92, %c0_93, %c0_94] : memref<4x8x1xf32, #tpu.memory_space<vmem>>, vector<1x8x1xf32>
    %145 = vector.shape_cast %144 : vector<1x8x1xf32> to vector<8x1xf32>
    %146 = vector.shape_cast %120 : vector<8x1xf32> to vector<1x8x1xf32>
    tpu.vector_store %arg11[%c3_92, %c0_93, %c0_94], %146 {strides = array<i32>} : memref<4x8x1xf32, #tpu.memory_space<vmem>>, vector<1x8x1xf32>,
    %c0_i32_95 = arith.constant 0 : i32
    %147 = arith.cmpi eq, %arg2, %c0_i32_95 : i32
    %148 = arith.extui %147 : i1 to i32
    %c0_i32_96 = arith.constant 0 : i32
    %149 = arith.cmpi ne, %148, %c0_i32_96 : i32
    scf.if %149 {
      %cst_97 = arith.constant 0.000000e+00 : f32
      %150 = vector.broadcast %cst_97 : f32 to vector<8x32xf32>
      %c0_98 = arith.constant 0 : index
      %c0_99 = arith.constant 0 : index
      %c0_100 = arith.constant 0 : index
      %151 = vector.load %arg12[%c0_98, %c0_99, %c0_100] : memref<4x8x1xf32, #tpu.memory_space<vmem>>, vector<1x8x1xf32>
      %152 = vector.shape_cast %151 : vector<1x8x1xf32> to vector<8x1xf32>
      %153 = tpu.reciprocal %152 {approx = true} : vector<8x1xf32> -> vector<8x1xf32>
      %c0_101 = arith.constant 0 : index
      %c0_102 = arith.constant 0 : index
      %c0_103 = arith.constant 0 : index
      %154 = vector.load %arg13[%c0_101, %c0_102, %c0_103] : memref<4x8x16xf32, #tpu.memory_space<vmem>>, vector<1x8x16xf32>
      %155 = vector.shape_cast %154 : vector<1x8x16xf32> to vector<8x16xf32>
      %156 = vector.broadcast %153 : vector<8x1xf32> to vector<8x16xf32>
      %157 = arith.mulf %155, %156 : vector<8x16xf32>
      %c0_104 = arith.constant 0 : index
      %c0_105 = arith.constant 0 : index
      %158 = vector.load %arg7[%c0_104, %c0_105] : memref<64x32xf32, #tpu.memory_space<vmem>>, vector<16x32xf32>
      %cst_106 = arith.constant dense<0.000000e+00> : vector<8x32xf32>
      %159 = tpu.matmul %157, %158, %cst_106 {dimension_numbers = #tpu.dot_dimension_numbers<[1], [0], [0], [1], [0, 0, 1, 1], [], []>} : vector<8x16xf32>, vector<16x32xf32>, vector<8x32xf32> -> vector<8x32xf32>
      %160 = arith.addf %150, %159 : vector<8x32xf32>
      %c1_107 = arith.constant 1 : index
      %c0_108 = arith.constant 0 : index
      %c0_109 = arith.constant 0 : index
      %161 = vector.load %arg12[%c1_107, %c0_108, %c0_109] : memref<4x8x1xf32, #tpu.memory_space<vmem>>, vector<1x8x1xf32>
      %162 = vector.shape_cast %161 : vector<1x8x1xf32> to vector<8x1xf32>
      %163 = tpu.reciprocal %162 {approx = true} : vector<8x1xf32> -> vector<8x1xf32>
      %c1_110 = arith.constant 1 : index
      %c0_111 = arith.constant 0 : index
      %c0_112 = arith.constant 0 : index
      %164 = vector.load %arg13[%c1_110, %c0_111, %c0_112] : memref<4x8x16xf32, #tpu.memory_space<vmem>>, vector<1x8x16xf32>
      %165 = vector.shape_cast %164 : vector<1x8x16xf32> to vector<8x16xf32>
      %166 = vector.broadcast %163 : vector<8x1xf32> to vector<8x16xf32>
      %167 = arith.mulf %165, %166 : vector<8x16xf32>
      %c16_113 = arith.constant 16 : index
      %c0_114 = arith.constant 0 : index
      %168 = vector.load %arg7[%c16_113, %c0_114] : memref<64x32xf32, #tpu.memory_space<vmem>>, vector<16x32xf32>
      %cst_115 = arith.constant dense<0.000000e+00> : vector<8x32xf32>
      %169 = tpu.matmul %167, %168, %cst_115 {dimension_numbers = #tpu.dot_dimension_numbers<[1], [0], [0], [1], [0, 0, 1, 1], [], []>} : vector<8x16xf32>, vector<16x32xf32>, vector<8x32xf32> -> vector<8x32xf32>
      %170 = arith.addf %160, %169 : vector<8x32xf32>
      %c2_116 = arith.constant 2 : index
      %c0_117 = arith.constant 0 : index
      %c0_118 = arith.constant 0 : index
      %171 = vector.load %arg12[%c2_116, %c0_117, %c0_118] : memref<4x8x1xf32, #tpu.memory_space<vmem>>, vector<1x8x1xf32>
      %172 = vector.shape_cast %171 : vector<1x8x1xf32> to vector<8x1xf32>
      %173 = tpu.reciprocal %172 {approx = true} : vector<8x1xf32> -> vector<8x1xf32>
      %c2_119 = arith.constant 2 : index
      %c0_120 = arith.constant 0 : index
      %c0_121 = arith.constant 0 : index
      %174 = vector.load %arg13[%c2_119, %c0_120, %c0_121] : memref<4x8x16xf32, #tpu.memory_space<vmem>>, vector<1x8x16xf32>
      %175 = vector.shape_cast %174 : vector<1x8x16xf32> to vector<8x16xf32>
      %176 = vector.broadcast %173 : vector<8x1xf32> to vector<8x16xf32>
      %177 = arith.mulf %175, %176 : vector<8x16xf32>
      %c32_122 = arith.constant 32 : index
      %c0_123 = arith.constant 0 : index
      %178 = vector.load %arg7[%c32_122, %c0_123] : memref<64x32xf32, #tpu.memory_space<vmem>>, vector<16x32xf32>
      %cst_124 = arith.constant dense<0.000000e+00> : vector<8x32xf32>
      %179 = tpu.matmul %177, %178, %cst_124 {dimension_numbers = #tpu.dot_dimension_numbers<[1], [0], [0], [1], [0, 0, 1, 1], [], []>} : vector<8x16xf32>, vector<16x32xf32>, vector<8x32xf32> -> vector<8x32xf32>
      %180 = arith.addf %170, %179 : vector<8x32xf32>
      %c3_125 = arith.constant 3 : index
      %c0_126 = arith.constant 0 : index
      %c0_127 = arith.constant 0 : index
      %181 = vector.load %arg12[%c3_125, %c0_126, %c0_127] : memref<4x8x1xf32, #tpu.memory_space<vmem>>, vector<1x8x1xf32>
      %182 = vector.shape_cast %181 : vector<1x8x1xf32> to vector<8x1xf32>
      %183 = tpu.reciprocal %182 {approx = true} : vector<8x1xf32> -> vector<8x1xf32>
      %c3_128 = arith.constant 3 : index
      %c0_129 = arith.constant 0 : index
      %c0_130 = arith.constant 0 : index
      %184 = vector.load %arg13[%c3_128, %c0_129, %c0_130] : memref<4x8x16xf32, #tpu.memory_space<vmem>>, vector<1x8x16xf32>
      %185 = vector.shape_cast %184 : vector<1x8x16xf32> to vector<8x16xf32>
      %186 = vector.broadcast %183 : vector<8x1xf32> to vector<8x16xf32>
      %187 = arith.mulf %185, %186 : vector<8x16xf32>
      %c48_131 = arith.constant 48 : index
      %c0_132 = arith.constant 0 : index
      %188 = vector.load %arg7[%c48_131, %c0_132] : memref<64x32xf32, #tpu.memory_space<vmem>>, vector<16x32xf32>
      %cst_133 = arith.constant dense<0.000000e+00> : vector<8x32xf32>
      %189 = tpu.matmul %187, %188, %cst_133 {dimension_numbers = #tpu.dot_dimension_numbers<[1], [0], [0], [1], [0, 0, 1, 1], [], []>} : vector<8x16xf32>, vector<16x32xf32>, vector<8x32xf32> -> vector<8x32xf32>
      %190 = arith.addf %180, %189 : vector<8x32xf32>
      %c0_134 = arith.constant 0 : index
      %c0_135 = arith.constant 0 : index
      %191 = vector.load %arg8[%c0_134, %c0_135] : memref<1x32xf32, #tpu.memory_space<vmem>>, vector<1x32xf32>
      %192 = vector.broadcast %191 : vector<1x32xf32> to vector<8x32xf32>
      %193 = arith.addf %190, %192 : vector<8x32xf32>
      %c0_136 = arith.constant 0 : index
      %c0_137 = arith.constant 0 : index
      %c0_138 = arith.constant 0 : index
      %194 = vector.load %arg9[%c0_136, %c0_137, %c0_138] : memref<1x8x32xf32, #tpu.memory_space<vmem>>, vector<1x8x32xf32>
      %195 = vector.shape_cast %194 : vector<1x8x32xf32> to vector<8x32xf32>
      %196 = vector.shape_cast %193 : vector<8x32xf32> to vector<1x8x32xf32>
      tpu.vector_store %arg9[%c0_136, %c0_137, %c0_138], %196 {strides = array<i32>} : memref<1x8x32xf32, #tpu.memory_space<vmem>>, vector<1x8x32xf32>,
    } else {
    }
    return
  }
  func.func @transform_0(%arg0: i32, %arg1: i32, %arg2: i32) -> (i32, i32, i32) {
    %c0_i32 = arith.constant 0 : i32
    %c0_i32_0 = arith.constant 0 : i32
    return %arg0, %arg1, %c0_i32 : i32, i32, i32
  }
  func.func @transform_1(%arg0: i32, %arg1: i32, %arg2: i32) -> (i32, i32, i32) {
    %c0_i32 = arith.constant 0 : i32
    %c0_i32_0 = arith.constant 0 : i32
    return %arg0, %arg2, %c0_i32 : i32, i32, i32
  }
  func.func @transform_2(%arg0: i32, %arg1: i32, %arg2: i32) -> (i32, i32) {
    %c0_i32 = arith.constant 0 : i32
    %c0_i32_0 = arith.constant 0 : i32
    %c0_i32_1 = arith.constant 0 : i32
    return %c0_i32, %c0_i32_0 : i32, i32
  }
  func.func @transform_3(%arg0: i32, %arg1: i32, %arg2: i32) -> (i32, i32) {
    %c0_i32 = arith.constant 0 : i32
    %c0_i32_0 = arith.constant 0 : i32
    %c0_i32_1 = arith.constant 0 : i32
    return %c0_i32, %c0_i32_0 : i32, i32
  }
  func.func @transform_4(%arg0: i32, %arg1: i32, %arg2: i32) -> (i32, i32) {
    %c0_i32 = arith.constant 0 : i32
    %c0_i32_0 = arith.constant 0 : i32
    %c0_i32_1 = arith.constant 0 : i32
    return %c0_i32, %c0_i32_0 : i32, i32
  }
  func.func @transform_5(%arg0: i32, %arg1: i32, %arg2: i32) -> (i32, i32) {
    %c0_i32 = arith.constant 0 : i32
    %c0_i32_0 = arith.constant 0 : i32
    %c0_i32_1 = arith.constant 0 : i32
    return %c0_i32, %c0_i32_0 : i32, i32
  }
  func.func @transform_6(%arg0: i32, %arg1: i32, %arg2: i32) -> (i32, i32, i32) {
    %c0_i32 = arith.constant 0 : i32
    %c0_i32_0 = arith.constant 0 : i32
    return %arg0, %arg1, %c0_i32 : i32, i32, i32
  }
}

</mosaic_0001>

<llo_original>
// kernel: tpu_custom_call.1
$region0: #{tpu_custom_call.1}
  #allocation0 [shape = 'u32[]', space=smem, size = 0x4, offset = 0x4, fixed_abs, tag = 'smem constant byte address 0x4 - core index']
  #allocation1 [shape = 'u32[144,128]{1,0:T(1,128)}', space=vmem, size = 0x12000, scoped, tag = 'internal scratch']
  #allocation2 [shape = 'f32[8,64]{1,0:T(8,128)}', space=vmem, size = 0x1000, scoped, tag = 'scratch operand']
  #allocation3 [shape = 'f32[4,8,1]{2,1,0:T(8,128)}', space=vmem, size = 0x4000, scoped, tag = 'scratch operand']
  #allocation4 [shape = 'f32[4,8,1]{2,1,0:T(8,128)}', space=vmem, size = 0x4000, scoped, tag = 'scratch operand']
  #allocation5 [shape = 'f32[4,8,16]{2,1,0:T(8,128)}', space=vmem, size = 0x4000, scoped, tag = 'scratch operand']
  %s0 = inlined_call_operand.vmem [shape: f32[2,8,32], index: 0, kind: input, shape index: {}]
  %s1 = inlined_call_operand.vmem [shape: f32[2,8,32], index: 1, kind: input, shape index: {}]
  %s2 = inlined_call_operand.vmem [shape: f32[32,64], index: 2, kind: input, shape index: {}]
  %s3 = inlined_call_operand.vmem [shape: f32[32,128], index: 3, kind: input, shape index: {}]
  %s4 = inlined_call_operand.vmem [shape: f32[64,32], index: 4, kind: input, shape index: {}]
  %s5 = inlined_call_operand.vmem [shape: f32[1,32], index: 5, kind: input, shape index: {}]
  %s6 = inlined_call_operand.hbm [shape: f32[2,8,32], index: 6, kind: output, shape index: {}]
  %s7 = sld [smem:[#allocation0]]
  $region65: #{tpu_custom_call.1} parent=0
    _
  %s9 = ssub.s32 1, %s7
  %s10 = scalar_select 0, %s9, %s7
  $region1: #{tpu_custom_call.1} parent=0
    #allocation6 [shape = 'u8[8192]{0}', space=vmem, size = 0x2000, scoped, tag = 'output window, operand 0']
    #allocation7 [shape = 's32[2]{0}', space=sflag, size = 0x8, scoped, tag = 'scoped memory for tpu_custom_call.1']
    %11 = vsyncpa [#allocation7], 0
    %s12 = scalar_lea.sflag [#allocation7], 1
    %13 = vsyncpa %s12, 0
    loop: start=0, step=1, limit=4
    $region2: #{tpu_custom_call.1} parent=1 // loop_pre_header
      _
    $region3: #{tpu_custom_call.1} parent=1 // loop_header
      %s15 = sphi 0, %s19
      %p16 = scmp.ge.s32.totalorder %s15, 4
      %s22 = sphi 0, %s41
      %s23 = sphi 0, %s37
      %s24 = sphi 0, %s33
      %s25 = sphi 0, %s22
      %s26 = sphi 0, %s23
      %s27 = sphi 0, %s24
      %s28 = sphi 0, %s25
      %s29 = sphi 0, %s26
      %s30 = sphi 0, %s27
      %s46 = sphi 0, %s48
      %s49 = sphi 0, %s46
      %s50 = sphi 0, %s49
      %s66 = sphi 0, %s50
      %s74 = sphi 0, %s76
      %s77 = sphi 0, %s74
      %s78 = sphi 0, %s77
      %s94 = sphi 0, %s78
      %s98 = sphi 0, %s98
      %s100 = sphi 0, %s98
      %s101 = sphi 0, %s100
      %s115 = sphi 0, %s101
      %s119 = sphi 0, %s119
      %s121 = sphi 0, %s119
      %s122 = sphi 0, %s121
      %s136 = sphi 0, %s122
      %s140 = sphi 0, %s140
      %s142 = sphi 0, %s140
      %s143 = sphi 0, %s142
      %s157 = sphi 0, %s143
      %s161 = sphi 0, %s161
      %s163 = sphi 0, %s161
      %s164 = sphi 0, %s163
      %s178 = sphi 0, %s164
      %s186 = sphi 0, %s188
      %s189 = sphi 0, %s186
      %s190 = sphi 0, %s189
      %s206 = sphi 0, %s190
    $region4: #{tpu_custom_call.1} parent=1 // loop_header_branch
      %18 = sbr.rel (%p16) target = $region8
    $region5: #{tpu_custom_call.1} parent=1 // loop_body
      %s20 = ssub.s32 %s15, 1
      %s21 = ssub.s32 %s15, 2
      %s31 = sadd.s32 1, %s24
      %p32 = scmp.ge.s32.totalorder %s31, 1
      %s33 = scalar_select %p32, 0, %s31
      %s34 = sadd.s32 1, %s23
      %s35 = scalar_select %p32, %s34, %s23
      %p36 = scmp.ge.s32.totalorder %s35, 1
      %s37 = scalar_select %p36, 0, %s35
      %s38 = sadd.s32 1, %s22
      %s39 = scalar_select %p36, %s38, %s22
      %p40 = scmp.ge.s32.totalorder %s39, 2
      %s41 = scalar_select %p40, 0, %s39
      %s42 = ssub.s32 %s22, %s41
      %s43 = ssub.s32 %s23, %s37
      %s44 = sor.u32 %s42, %s43
      %p45 = scmp.eq.s32.totalorder %s44, 0
      %s47 = sadd.s32 %s46, 1
      %s48 = scalar_select %p45, %s46, %s47
      %p51 = pneg %p45
      %p52 = scmp.eq.s32.totalorder %s15, 1
      %p53 = por %p51, %p52
      %p54 = scmp.ne.s32.totalorder %s46, %s49
      %p55 = scmp.eq.s32.totalorder %s15, 0
      %p56 = por %p54, %p55
      %p57 = scmp.ne.s32.totalorder %s46, %s49
      %p58 = scmp.eq.s32.totalorder %s20, 1
      %p59 = por %p57, %p58
      %p60 = scmp.ne.s32.totalorder %s49, %s50
      %p61 = scmp.eq.s32.totalorder %s20, 0
      %p62 = por %p60, %p61
      %p63 = scmp.ne.s32.totalorder %s49, %s50
      %p64 = scmp.eq.s32.totalorder %s21, 1
      %p65 = por %p63, %p64
      %p67 = scmp.ne.s32.totalorder %s50, %s66
      %p68 = scmp.eq.s32.totalorder %s21, 0
      %p69 = por %p67, %p68
      %s70 = ssub.s32 %s22, %s41
      %s71 = ssub.s32 %s24, %s33
      %s72 = sor.u32 %s70, %s71
      %p73 = scmp.eq.s32.totalorder %s72, 0
      %s75 = sadd.s32 %s74, 1
      %s76 = scalar_select %p73, %s74, %s75
      %p79 = pneg %p73
      %p80 = scmp.eq.s32.totalorder %s15, 1
      %p81 = por %p79, %p80
      %p82 = scmp.ne.s32.totalorder %s74, %s77
      %p83 = scmp.eq.s32.totalorder %s15, 0
      %p84 = por %p82, %p83
      %p85 = scmp.ne.s32.totalorder %s74, %s77
      %p86 = scmp.eq.s32.totalorder %s20, 1
      %p87 = por %p85, %p86
      %p88 = scmp.ne.s32.totalorder %s77, %s78
      %p89 = scmp.eq.s32.totalorder %s20, 0
      %p90 = por %p88, %p89
      %p91 = scmp.ne.s32.totalorder %s77, %s78
      %p92 = scmp.eq.s32.totalorder %s21, 1
      %p93 = por %p91, %p92
      %p95 = scmp.ne.s32.totalorder %s78, %s94
      %p96 = scmp.eq.s32.totalorder %s21, 0
      %p97 = por %p95, %p96
      %s99 = sadd.s32 %s98, 1
      %p102 = scmp.eq.s32.totalorder %s15, 1
      %p103 = scmp.ne.s32.totalorder %s98, %s100
      %p104 = scmp.eq.s32.totalorder %s15, 0
      %p105 = por %p103, %p104
      %p106 = scmp.ne.s32.totalorder %s98, %s100
      %p107 = scmp.eq.s32.totalorder %s20, 1
      %p108 = por %p106, %p107
      %p109 = scmp.ne.s32.totalorder %s100, %s101
      %p110 = scmp.eq.s32.totalorder %s20, 0
      %p111 = por %p109, %p110
      %p112 = scmp.ne.s32.totalorder %s100, %s101
      %p113 = scmp.eq.s32.totalorder %s21, 1
      %p114 = por %p112, %p113
      %p116 = scmp.ne.s32.totalorder %s101, %s115
      %p117 = scmp.eq.s32.totalorder %s21, 0
      %p118 = por %p116, %p117
      %s120 = sadd.s32 %s119, 1
      %p123 = scmp.eq.s32.totalorder %s15, 1
      %p124 = scmp.ne.s32.totalorder %s119, %s121
      %p125 = scmp.eq.s32.totalorder %s15, 0
      %p126 = por %p124, %p125
      %p127 = scmp.ne.s32.totalorder %s119, %s121
      %p128 = scmp.eq.s32.totalorder %s20, 1
      %p129 = por %p127, %p128
      %p130 = scmp.ne.s32.totalorder %s121, %s122
      %p131 = scmp.eq.s32.totalorder %s20, 0
      %p132 = por %p130, %p131
      %p133 = scmp.ne.s32.totalorder %s121, %s122
      %p134 = scmp.eq.s32.totalorder %s21, 1
      %p135 = por %p133, %p134
      %p137 = scmp.ne.s32.totalorder %s122, %s136
      %p138 = scmp.eq.s32.totalorder %s21, 0
      %p139 = por %p137, %p138
      %s141 = sadd.s32 %s140, 1
      %p144 = scmp.eq.s32.totalorder %s15, 1
      %p145 = scmp.ne.s32.totalorder %s140, %s142
      %p146 = scmp.eq.s32.totalorder %s15, 0
      %p147 = por %p145, %p146
      %p148 = scmp.ne.s32.totalorder %s140, %s142
      %p149 = scmp.eq.s32.totalorder %s20, 1
      %p150 = por %p148, %p149
      %p151 = scmp.ne.s32.totalorder %s142, %s143
      %p152 = scmp.eq.s32.totalorder %s20, 0
      %p153 = por %p151, %p152
      %p154 = scmp.ne.s32.totalorder %s142, %s143
      %p155 = scmp.eq.s32.totalorder %s21, 1
      %p156 = por %p154, %p155
      %p158 = scmp.ne.s32.totalorder %s143, %s157
      %p159 = scmp.eq.s32.totalorder %s21, 0
      %p160 = por %p158, %p159
      %s162 = sadd.s32 %s161, 1
      %p165 = scmp.eq.s32.totalorder %s15, 1
      %p166 = scmp.ne.s32.totalorder %s161, %s163
      %p167 = scmp.eq.s32.totalorder %s15, 0
      %p168 = por %p166, %p167
      %p169 = scmp.ne.s32.totalorder %s161, %s163
      %p170 = scmp.eq.s32.totalorder %s20, 1
      %p171 = por %p169, %p170
      %p172 = scmp.ne.s32.totalorder %s163, %s164
      %p173 = scmp.eq.s32.totalorder %s20, 0
      %p174 = por %p172, %p173
      %p175 = scmp.ne.s32.totalorder %s163, %s164
      %p176 = scmp.eq.s32.totalorder %s21, 1
      %p177 = por %p175, %p176
      %p179 = scmp.ne.s32.totalorder %s164, %s178
      %p180 = scmp.eq.s32.totalorder %s21, 0
      %p181 = por %p179, %p180
      %s182 = ssub.s32 %s22, %s41
      %s183 = ssub.s32 %s23, %s37
      %s184 = sor.u32 %s182, %s183
      %p185 = scmp.eq.s32.totalorder %s184, 0
      %s187 = sadd.s32 %s186, 1
      %s188 = scalar_select %p185, %s186, %s187
      %p191 = pneg %p185
      %p192 = scmp.eq.s32.totalorder %s15, 1
      %p193 = por %p191, %p192
      %p194 = scmp.ne.s32.totalorder %s186, %s189
      %p195 = scmp.eq.s32.totalorder %s15, 0
      %p196 = por %p194, %p195
      %p197 = scmp.ne.s32.totalorder %s186, %s189
      %p198 = scmp.eq.s32.totalorder %s20, 1
      %p199 = por %p197, %p198
      %p200 = scmp.ne.s32.totalorder %s189, %s190
      %p201 = scmp.eq.s32.totalorder %s20, 0
      %p202 = por %p200, %p201
      %p203 = scmp.ne.s32.totalorder %s189, %s190
      %p204 = scmp.eq.s32.totalorder %s21, 1
      %p205 = por %p203, %p204
      %p207 = scmp.ne.s32.totalorder %s190, %s206
      %p208 = scmp.eq.s32.totalorder %s21, 0
      %p209 = por %p207, %p208
      %p210 = scmp.le.s32.totalorder 1, %s15
      %p211 = scmp.lt.s32.totalorder %s15, 3
      %p212 = pnand %p210, %p211
      %p213 = pneg %p212
      // Predicated region
      $region9: #{tpu_custom_call.1} parent=5 // pred_check
        _
      $region10: #{tpu_custom_call.1} parent=5 // pred_check_branch
        %215 = sbr.rel (%p212) target = $region12
      $region11: #{tpu_custom_call.1} parent=5 // pred_region
        %s216 = ssub.s32 %s15, 1
        // Predicated region
        $region13: #{tpu_custom_call.1} parent=11 // pred_check
          %p217 = pneg %p111
        $region14: #{tpu_custom_call.1} parent=11 // pred_check_branch
          %219 = sbr.rel (%p217) target = $region16
        $region15: #{tpu_custom_call.1} parent=11 // pred_region
          _
        $region16: #{tpu_custom_call.1} parent=11 // pred_fallthru
          _
        // Predicated region
        $region17: #{tpu_custom_call.1} parent=11 // pred_check
          %p220 = pneg %p132
        $region18: #{tpu_custom_call.1} parent=11 // pred_check_branch
          %222 = sbr.rel (%p220) target = $region20
        $region19: #{tpu_custom_call.1} parent=11 // pred_region
          _
        $region20: #{tpu_custom_call.1} parent=11 // pred_fallthru
          _
        // Predicated region
        $region21: #{tpu_custom_call.1} parent=11 // pred_check
          %p223 = pneg %p153
        $region22: #{tpu_custom_call.1} parent=11 // pred_check_branch
          %225 = sbr.rel (%p223) target = $region24
        $region23: #{tpu_custom_call.1} parent=11 // pred_region
          _
        $region24: #{tpu_custom_call.1} parent=11 // pred_fallthru
          _
        // Predicated region
        $region25: #{tpu_custom_call.1} parent=11 // pred_check
          %p226 = pneg %p174
        $region26: #{tpu_custom_call.1} parent=11 // pred_check_branch
          %228 = sbr.rel (%p226) target = $region28
        $region27: #{tpu_custom_call.1} parent=11 // pred_region
          _
        $region28: #{tpu_custom_call.1} parent=11 // pred_fallthru
          _
      $region12: #{tpu_custom_call.1} parent=5 // pred_fallthru
        _
      %p229 = scmp.lt.s32.totalorder %s15, 2
      // Predicated region
      $region29: #{tpu_custom_call.1} parent=5 // pred_check
        %p230 = pneg %p229
      $region30: #{tpu_custom_call.1} parent=5 // pred_check_branch
        %232 = sbr.rel (%p230) target = $region32
      $region31: #{tpu_custom_call.1} parent=5 // pred_region
        // Predicated region
        $region33: #{tpu_custom_call.1} parent=31 // pred_check
          %p233 = pneg %p56
        $region34: #{tpu_custom_call.1} parent=31 // pred_check_branch
          %235 = sbr.rel (%p233) target = $region36
        $region35: #{tpu_custom_call.1} parent=31 // pred_region
          %p236 = scmp.lt.s32.totalorder %s22, 1
          %s237 = scalar_select %p236, %s22, 1
          %p238 = scmp.lt.s32.totalorder %s23, 0
          %s239 = scalar_select %p238, %s23, 0
          %s240 = sadd.s32 %s239, %s237
          %s241 = smul.addr %s240, 8
          %s242 = scalar_lea.vmem %s0, %s241
        $region36: #{tpu_custom_call.1} parent=31 // pred_fallthru
          _
        // Predicated region
        $region37: #{tpu_custom_call.1} parent=31 // pred_check
          %p243 = pneg %p84
        $region38: #{tpu_custom_call.1} parent=31 // pred_check_branch
          %245 = sbr.rel (%p243) target = $region40
        $region39: #{tpu_custom_call.1} parent=31 // pred_region
          %p246 = scmp.lt.s32.totalorder %s22, 1
          %s247 = scalar_select %p246, %s22, 1
          %p248 = scmp.lt.s32.totalorder %s24, 0
          %s249 = scalar_select %p248, %s24, 0
          %s250 = sadd.s32 %s249, %s247
          %s251 = smul.addr %s250, 8
          %s252 = scalar_lea.vmem %s1, %s251
        $region40: #{tpu_custom_call.1} parent=31 // pred_fallthru
          _
      $region32: #{tpu_custom_call.1} parent=5 // pred_fallthru
        _
      %p253 = scmp.le.s32.totalorder 1, %s15
      %p254 = scmp.lt.s32.totalorder %s15, 3
      %p255 = pnand %p253, %p254
      %p256 = pneg %p255
      // Predicated region
      $region41: #{tpu_custom_call.1} parent=5 // pred_check
        _
      $region42: #{tpu_custom_call.1} parent=5 // pred_check_branch
        %258 = sbr.rel (%p255) target = $region44
      $region43: #{tpu_custom_call.1} parent=5 // pred_region
        %s259 = ssub.s32 %s15, 1
        %p260 = scmp.lt.s32.totalorder %s25, 1
        %s261 = scalar_select %p260, %s25, 1
        %p262 = scmp.lt.s32.totalorder %s26, 0
        %s263 = scalar_select %p262, %s26, 0
        %s264 = sadd.s32 %s263, %s261
        %s265 = smul.addr %s264, 8
        %s266 = scalar_lea.vmem %s0, %s265
        %p267 = pneg %p62
        %p268 = pneg %p59
        %p269 = scmp.lt.s32.totalorder %s25, 1
        %s270 = scalar_select %p269, %s25, 1
        %p271 = scmp.lt.s32.totalorder %s27, 0
        %s272 = scalar_select %p271, %s27, 0
        %s273 = sadd.s32 %s272, %s270
        %s274 = smul.addr %s273, 8
        %s275 = scalar_lea.vmem %s1, %s274
        %p276 = pneg %p90
        %p277 = pneg %p87
        %p278 = pneg %p111
        %p279 = pneg %p108
        %p280 = pneg %p132
        %p281 = pneg %p129
        %p282 = pneg %p153
        %p283 = pneg %p150
        %p284 = pneg %p174
        %p285 = pneg %p171
        %p286 = pneg %p202
        %p287 = pneg %p199
        %s288 = sand.u32 %s189, 1
        %s289 = scalar_lea.sflag [#allocation7], %s288
        %s290 = sand.u32 %s189, 1
        %s291 = smul.addr %s290, 8
        %s292 = scalar_lea.vmem [#allocation6], %s291
        %p293 = scmp.lt.s32.totalorder %s25, 1
        %s294 = scalar_select %p293, %s25, 1
        %p295 = scmp.lt.s32.totalorder %s26, 0
        %s296 = scalar_select %p295, %s26, 0
        %s297 = sadd.s32 %s296, %s294
        %s298 = smul.addr %s297, 8
        %s299 = scalar_lea.vmem %s0, %s298
        %p300 = scmp.lt.s32.totalorder %s25, 1
        %s301 = scalar_select %p300, %s25, 1
        %p302 = scmp.lt.s32.totalorder %s27, 0
        %s303 = scalar_select %p302, %s27, 0
        %s304 = sadd.s32 %s303, %s301
        %s305 = smul.addr %s304, 8
        %s306 = scalar_lea.vmem %s1, %s305
        %p307 = scmp.eq.s32.totalorder %s27, 0
        // Predicated region
        $region45: #{tpu_custom_call.1} parent=43 // pred_check
          %p308 = pneg %p307
        $region46: #{tpu_custom_call.1} parent=43 // pred_check_branch
          %310 = sbr.rel (%p308) target = $region48
        $region47: #{tpu_custom_call.1} parent=43 // pred_region
          %v311 = vld [vmem:[%s299] sm:$0xff]
          %v312 = vld [vmem:[%s2] sm:$0xff]
          %v313 = vld [vmem:[%s2 + $0x8] sm:$0xff]
          %v314 = vld [vmem:[%s2 + $0x10] sm:$0xff]
          %v315 = vld [vmem:[%s2 + $0x18] sm:$0xff]
          %vm316 = vcmask 261120
          %v318 = vsel %vm316, %v311, 0
          %320 = vmatprep.subr.mxu0 0.0
          %321 = vmatpush1.msra.mxu0 0.0
          %322 = vmatprep.subr.mxu0 0.0
          %323 = vmatpush1.msra.mxu0 0.0
          %324 = vmatprep.subr.mxu0 0.0
          %325 = vmatpush1.msra.mxu0 0.0
          %326 = vmatprep.subr.mxu0 0.0
          %327 = vmatpush1.msra.mxu0 0.0
          %328 = vmatprep.subr.mxu0 0.0
          %329 = vmatpush1.msra.mxu0 0.0
          %330 = vmatprep.subr.mxu0 0.0
          %331 = vmatpush1.msra.mxu0 0.0
          %332 = vmatprep.subr.mxu0 0.0
          %333 = vmatpush1.msra.mxu0 0.0
          %334 = vmatprep.subr.mxu0 0.0
          %335 = vmatpush1.msra.mxu0 0.0
          %336 = vmatprep.subr.mxu0 0.0
          %337 = vmatpush1.msra.mxu0 0.0
          %338 = vmatprep.subr.mxu0 0.0
          %339 = vmatpush1.msra.mxu0 0.0
          %340 = vmatprep.subr.mxu0 0.0
          %341 = vmatpush1.msra.mxu0 0.0
          %342 = vmatprep.subr.mxu0 0.0
          %343 = vmatpush1.msra.mxu0 0.0
          %344 = vmatprep.subr.mxu0 0.0
          %345 = vmatpush1.msra.mxu0 %v315
          %346 = vmatprep.subr.mxu0 0.0
          %347 = vmatpush1.msra.mxu0 %v314
          %348 = vmatprep.subr.mxu0 0.0
          %349 = vmatpush1.msra.mxu0 %v313
          %350 = vmatprep.subr.mxu0 0.0
          %351 = vmatpush1.msra.mxu0 %v312
          %352 = vmatprep.subr.mxu0 0.0
          %353 = vmatpush2.msra.mxu0 0.0
          %354 = vmatprep.subr.mxu0 0.0
          %355 = vmatpush2.msra.mxu0 0.0
          %356 = vmatprep.subr.mxu0 0.0
          %357 = vmatpush2.msra.mxu0 0.0
          %358 = vmatprep.subr.mxu0 0.0
          %359 = vmatpush2.msra.mxu0 0.0
          %360 = vmatprep.subr.mxu0 0.0
          %361 = vmatpush2.msra.mxu0 0.0
          %362 = vmatprep.subr.mxu0 0.0
          %363 = vmatpush2.msra.mxu0 0.0
          %364 = vmatprep.subr.mxu0 0.0
          %365 = vmatpush2.msra.mxu0 0.0
          %366 = vmatprep.subr.mxu0 0.0
          %367 = vmatpush2.msra.mxu0 0.0
          %368 = vmatprep.subr.mxu0 0.0
          %369 = vmatpush2.msra.mxu0 0.0
          %370 = vmatprep.subr.mxu0 0.0
          %371 = vmatpush2.msra.mxu0 0.0
          %372 = vmatprep.subr.mxu0 0.0
          %373 = vmatpush2.msra.mxu0 0.0
          %374 = vmatprep.subr.mxu0 0.0
          %375 = vmatpush2.msra.mxu0 0.0
          %376 = vmatprep.subr.mxu0 0.0
          %377 = vmatpush2.msra.mxu0 0.0
          %378 = vmatprep.subr.mxu0 0.0
          %379 = vmatpush2.msra.mxu0 0.0
          %380 = vmatprep.subr.mxu0 0.0
          %381 = vmatpush2.msra.mxu0 0.0
          %382 = vmatprep.subr.mxu0 0.0
          %383 = vmatpush2.msra.mxu0 0.0
          %384 = vmatprep.mubr.f32.mxu0 0.0
          %385 = vmatmul.mubr.f32.gmra.mxu0 %v318
          %v386 = vpop.f32.mrf.mxu0
          %v387 = vadd.f32 0.0, %v386
          %v388 = vpop.f32.mrf.mxu0
          %389 = vdwg.mxu0
          %v390 = vmul.f32 %v387, 0.25
          %vm391 = vcmask 523264
          %392 = vst.msk [vmem:[#allocation2] sm:$0xff] %vm391, %v390
          %vm393 = vcmask 7168
          %394 = vst.msk [vmem:[#allocation3] sm:$0xff] %vm393, -inf
          %395 = vst.msk [vmem:[#allocation3 + $0x8] sm:$0xff] %vm393, -inf
          %396 = vst.msk [vmem:[#allocation3 + $0x10] sm:$0xff] %vm393, -inf
          %397 = vst.msk [vmem:[#allocation3 + $0x18] sm:$0xff] %vm393, -inf
          %398 = vst.msk [vmem:[#allocation4] sm:$0xff] %vm393, 0.0
          %399 = vst.msk [vmem:[#allocation4 + $0x8] sm:$0xff] %vm393, 0.0
          %400 = vst.msk [vmem:[#allocation4 + $0x10] sm:$0xff] %vm393, 0.0
          %401 = vst.msk [vmem:[#allocation4 + $0x18] sm:$0xff] %vm393, 0.0
          %vm402 = vcmask 130048
          %403 = vst.msk [vmem:[#allocation5] sm:$0xff] %vm402, 0.0
          %404 = vst.msk [vmem:[#allocation5 + $0x8] sm:$0xff] %vm402, 0.0
          %405 = vst.msk [vmem:[#allocation5 + $0x10] sm:$0xff] %vm402, 0.0
          %406 = vst.msk [vmem:[#allocation5 + $0x18] sm:$0xff] %vm402, 0.0
        $region48: #{tpu_custom_call.1} parent=43 // pred_fallthru
          _
        %v407 = vld [vmem:[%s306] sm:$0xff]
        %v408 = vld [vmem:[%s3] sm:$0xff]
        %v409 = vld [vmem:[%s3 + $0x8] sm:$0xff]
        %v410 = vld [vmem:[%s3 + $0x10] sm:$0xff]
        %v411 = vld [vmem:[%s3 + $0x18] sm:$0xff]
        %vm412 = vcmask 261120
        %v414 = vsel %vm412, %v407, 0
        %416 = vmatprep.subr.mxu0 0.0
        %417 = vmatpush1.msra.mxu0 0.0
        %418 = vmatprep.subr.mxu0 0.0
        %419 = vmatpush1.msra.mxu0 0.0
        %420 = vmatprep.subr.mxu0 0.0
        %421 = vmatpush1.msra.mxu0 0.0
        %422 = vmatprep.subr.mxu0 0.0
        %423 = vmatpush1.msra.mxu0 0.0
        %424 = vmatprep.subr.mxu0 0.0
        %425 = vmatpush1.msra.mxu0 0.0
        %426 = vmatprep.subr.mxu0 0.0
        %427 = vmatpush1.msra.mxu0 0.0
        %428 = vmatprep.subr.mxu0 0.0
        %429 = vmatpush1.msra.mxu0 0.0
        %430 = vmatprep.subr.mxu0 0.0
        %431 = vmatpush1.msra.mxu0 0.0
        %432 = vmatprep.subr.mxu0 0.0
        %433 = vmatpush1.msra.mxu0 0.0
        %434 = vmatprep.subr.mxu0 0.0
        %435 = vmatpush1.msra.mxu0 0.0
        %436 = vmatprep.subr.mxu0 0.0
        %437 = vmatpush1.msra.mxu0 0.0
        %438 = vmatprep.subr.mxu0 0.0
        %439 = vmatpush1.msra.mxu0 0.0
        %440 = vmatprep.subr.mxu0 0.0
        %441 = vmatpush1.msra.mxu0 %v411
        %442 = vmatprep.subr.mxu0 0.0
        %443 = vmatpush1.msra.mxu0 %v410
        %444 = vmatprep.subr.mxu0 0.0
        %445 = vmatpush1.msra.mxu0 %v409
        %446 = vmatprep.subr.mxu0 0.0
        %447 = vmatpush1.msra.mxu0 %v408
        %448 = vmatprep.subr.mxu0 0.0
        %449 = vmatpush2.msra.mxu0 0.0
        %450 = vmatprep.subr.mxu0 0.0
        %451 = vmatpush2.msra.mxu0 0.0
        %452 = vmatprep.subr.mxu0 0.0
        %453 = vmatpush2.msra.mxu0 0.0
        %454 = vmatprep.subr.mxu0 0.0
        %455 = vmatpush2.msra.mxu0 0.0
        %456 = vmatprep.subr.mxu0 0.0
        %457 = vmatpush2.msra.mxu0 0.0
        %458 = vmatprep.subr.mxu0 0.0
        %459 = vmatpush2.msra.mxu0 0.0
        %460 = vmatprep.subr.mxu0 0.0
        %461 = vmatpush2.msra.mxu0 0.0
        %462 = vmatprep.subr.mxu0 0.0
        %463 = vmatpush2.msra.mxu0 0.0
        %464 = vmatprep.subr.mxu0 0.0
        %465 = vmatpush2.msra.mxu0 0.0
        %466 = vmatprep.subr.mxu0 0.0
        %467 = vmatpush2.msra.mxu0 0.0
        %468 = vmatprep.subr.mxu0 0.0
        %469 = vmatpush2.msra.mxu0 0.0
        %470 = vmatprep.subr.mxu0 0.0
        %471 = vmatpush2.msra.mxu0 0.0
        %472 = vmatprep.subr.mxu0 0.0
        %473 = vmatpush2.msra.mxu0 0.0
        %474 = vmatprep.subr.mxu0 0.0
        %475 = vmatpush2.msra.mxu0 0.0
        %476 = vmatprep.subr.mxu0 0.0
        %477 = vmatpush2.msra.mxu0 0.0
        %478 = vmatprep.subr.mxu0 0.0
        %479 = vmatpush2.msra.mxu0 0.0
        %480 = vmatprep.mubr.f32.mxu0 0.0
        %481 = vmatmul.mubr.f32.gmra.mxu0 %v414
        %v482 = vpop.f32.mrf.mxu0
        %v483 = vadd.f32 0.0, %v482
        %v484 = vpop.f32.mrf.mxu0
        %485 = vdwg.mxu0
        %v486 = vld [vmem:[#allocation2] sm:$0xff]
        %vm487 = vcmask 130048
        %v489 = vsel %vm487, %v486, 0
        %v492 = vsel %vm487, %v483, 0
        %494 = vmatprep.subr.mxu0 0.0
        %495 = vmatpush1.xpose.msra.mxu0 0.0
        %496 = vmatprep.subr.mxu0 0.0
        %497 = vmatpush1.xpose.msra.mxu0 0.0
        %498 = vmatprep.subr.mxu0 0.0
        %499 = vmatpush1.xpose.msra.mxu0 0.0
        %500 = vmatprep.subr.mxu0 0.0
        %501 = vmatpush1.xpose.msra.mxu0 0.0
        %502 = vmatprep.subr.mxu0 0.0
        %503 = vmatpush1.xpose.msra.mxu0 0.0
        %504 = vmatprep.subr.mxu0 0.0
        %505 = vmatpush1.xpose.msra.mxu0 0.0
        %506 = vmatprep.subr.mxu0 0.0
        %507 = vmatpush1.xpose.msra.mxu0 0.0
        %508 = vmatprep.subr.mxu0 0.0
        %509 = vmatpush1.xpose.msra.mxu0 0.0
        %510 = vmatprep.subr.mxu0 0.0
        %511 = vmatpush1.xpose.msra.mxu0 0.0
        %512 = vmatprep.subr.mxu0 0.0
        %513 = vmatpush1.xpose.msra.mxu0 0.0
        %514 = vmatprep.subr.mxu0 0.0
        %515 = vmatpush1.xpose.msra.mxu0 0.0
        %516 = vmatprep.subr.mxu0 0.0
        %517 = vmatpush1.xpose.msra.mxu0 0.0
        %518 = vmatprep.subr.mxu0 0.0
        %519 = vmatpush1.xpose.msra.mxu0 0.0
        %520 = vmatprep.subr.mxu0 0.0
        %521 = vmatpush1.xpose.msra.mxu0 0.0
        %522 = vmatprep.subr.mxu0 0.0
        %523 = vmatpush1.xpose.msra.mxu0 0.0
        %524 = vmatprep.subr.mxu0 0.0
        %525 = vmatpush1.xpose.msra.mxu0 %v492
        %526 = vmatprep.subr.mxu0 0.0
        %527 = vmatpush2.xpose.msra.mxu0 0.0
        %528 = vmatprep.subr.mxu0 0.0
        %529 = vmatpush2.xpose.msra.mxu0 0.0
        %530 = vmatprep.subr.mxu0 0.0
        %531 = vmatpush2.xpose.msra.mxu0 0.0
        %532 = vmatprep.subr.mxu0 0.0
        %533 = vmatpush2.xpose.msra.mxu0 0.0
        %534 = vmatprep.subr.mxu0 0.0
        %535 = vmatpush2.xpose.msra.mxu0 0.0
        %536 = vmatprep.subr.mxu0 0.0
        %537 = vmatpush2.xpose.msra.mxu0 0.0
        %538 = vmatprep.subr.mxu0 0.0
        %539 = vmatpush2.xpose.msra.mxu0 0.0
        %540 = vmatprep.subr.mxu0 0.0
        %541 = vmatpush2.xpose.msra.mxu0 0.0
        %542 = vmatprep.subr.mxu0 0.0
        %543 = vmatpush2.xpose.msra.mxu0 0.0
        %544 = vmatprep.subr.mxu0 0.0
        %545 = vmatpush2.xpose.msra.mxu0 0.0
        %546 = vmatprep.subr.mxu0 0.0
        %547 = vmatpush2.xpose.msra.mxu0 0.0
        %548 = vmatprep.subr.mxu0 0.0
        %549 = vmatpush2.xpose.msra.mxu0 0.0
        %550 = vmatprep.subr.mxu0 0.0
        %551 = vmatpush2.xpose.msra.mxu0 0.0
        %552 = vmatprep.subr.mxu0 0.0
        %553 = vmatpush2.xpose.msra.mxu0 0.0
        %554 = vmatprep.subr.mxu0 0.0
        %555 = vmatpush2.xpose.msra.mxu0 0.0
        %556 = vmatprep.subr.mxu0 0.0
        %557 = vmatpush2.xpose.msra.mxu0 0.0
        %558 = vmatprep.mubr.f32.mxu0 0.0
        %559 = vmatmul.mubr.f32.gmra.mxu0 %v489
        %v560 = vpop.f32.mrf.mxu0
        %v561 = vadd.f32 0.0, %v560
        %v562 = vpop.f32.mrf.mxu0
        %563 = vdwg.mxu0
        %v564 = vld [vmem:[#allocation3] sm:$0xff]
        %vm565 = vcmask 64512
        %v566 = vsel %vm565, %v561, -inf
        %567 = vmax.xlane.f32.xlu0 %v566
        %v568 = vpop.xlane.xlu0 %567
        %v569 = vmax.f32 %v564, %v568
        %v570 = vsub.f32 %v564, %v569
        %v571 = vmul.f32 %v570, 1.442695
        %v572 = vpow.pop %v571
        %574 = vset.pattern.permute.xlu0 0
        %575 = vperm.xlu0 %574, %v569
        %v576 = vpop.permute.xlu0 %575
        %v578 = vsub.f32 %v561, %v576
        %v579 = vmul.f32 %v578, 1.442695
        %v580 = vpow.pop %v579
        %v581 = vld [vmem:[#allocation4] sm:$0xff]
        %v582 = vmul.f32 %v572, %v581
        %v583 = vsel %vm565, %v580, 0.0
        %584 = vadd.xlane.f32.xlu0 %v583
        %v585 = vpop.xlane.xlu0 %584
        %v586 = vadd.f32 %v582, %v585
        %vm587 = vcmask 7168
        %588 = vst.msk [vmem:[#allocation4] sm:$0xff] %vm587, %v586
        %v589 = vld [vmem:[#allocation5] sm:$0xff]
        %591 = vset.pattern.permute.xlu0 0
        %592 = vperm.xlu0 %591, %v572
        %v593 = vpop.permute.xlu0 %592
        %v595 = vmul.f32 %v593, %v589
        %596 = vrot.lane.b32.xlu0 %v483, 64
        %v597 = vpop.permute.xlu0 %596
        %v600 = vsel %vm565, %v580, 0
        %602 = vmatprep.subr.mxu0 0.0
        %603 = vmatpush1.msra.mxu0 0.0
        %604 = vmatprep.subr.mxu0 0.0
        %605 = vmatpush1.msra.mxu0 0.0
        %606 = vmatprep.subr.mxu0 0.0
        %607 = vmatpush1.msra.mxu0 0.0
        %608 = vmatprep.subr.mxu0 0.0
        %609 = vmatpush1.msra.mxu0 0.0
        %610 = vmatprep.subr.mxu0 0.0
        %611 = vmatpush1.msra.mxu0 0.0
        %612 = vmatprep.subr.mxu0 0.0
        %613 = vmatpush1.msra.mxu0 0.0
        %614 = vmatprep.subr.mxu0 0.0
        %615 = vmatpush1.msra.mxu0 0.0
        %616 = vmatprep.subr.mxu0 0.0
        %617 = vmatpush1.msra.mxu0 0.0
        %618 = vmatprep.subr.mxu0 0.0
        %619 = vmatpush1.msra.mxu0 0.0
        %620 = vmatprep.subr.mxu0 0.0
        %621 = vmatpush1.msra.mxu0 0.0
        %622 = vmatprep.subr.mxu0 0.0
        %623 = vmatpush1.msra.mxu0 0.0
        %624 = vmatprep.subr.mxu0 0.0
        %625 = vmatpush1.msra.mxu0 0.0
        %626 = vmatprep.subr.mxu0 0.0
        %627 = vmatpush1.msra.mxu0 0.0
        %628 = vmatprep.subr.mxu0 0.0
        %629 = vmatpush1.msra.mxu0 0.0
        %630 = vmatprep.subr.mxu0 0.0
        %631 = vmatpush1.msra.mxu0 0.0
        %632 = vmatprep.subr.mxu0 0.0
        %633 = vmatpush1.msra.mxu0 %v597
        %634 = vmatprep.subr.mxu0 0.0
        %635 = vmatpush2.msra.mxu0 0.0
        %636 = vmatprep.subr.mxu0 0.0
        %637 = vmatpush2.msra.mxu0 0.0
        %638 = vmatprep.subr.mxu0 0.0
        %639 = vmatpush2.msra.mxu0 0.0
        %640 = vmatprep.subr.mxu0 0.0
        %641 = vmatpush2.msra.mxu0 0.0
        %642 = vmatprep.subr.mxu0 0.0
        %643 = vmatpush2.msra.mxu0 0.0
        %644 = vmatprep.subr.mxu0 0.0
        %645 = vmatpush2.msra.mxu0 0.0
        %646 = vmatprep.subr.mxu0 0.0
        %647 = vmatpush2.msra.mxu0 0.0
        %648 = vmatprep.subr.mxu0 0.0
        %649 = vmatpush2.msra.mxu0 0.0
        %650 = vmatprep.subr.mxu0 0.0
        %651 = vmatpush2.msra.mxu0 0.0
        %652 = vmatprep.subr.mxu0 0.0
        %653 = vmatpush2.msra.mxu0 0.0
        %654 = vmatprep.subr.mxu0 0.0
        %655 = vmatpush2.msra.mxu0 0.0
        %656 = vmatprep.subr.mxu0 0.0
        %657 = vmatpush2.msra.mxu0 0.0
        %658 = vmatprep.subr.mxu0 0.0
        %659 = vmatpush2.msra.mxu0 0.0
        %660 = vmatprep.subr.mxu0 0.0
        %661 = vmatpush2.msra.mxu0 0.0
        %662 = vmatprep.subr.mxu0 0.0
        %663 = vmatpush2.msra.mxu0 0.0
        %664 = vmatprep.subr.mxu0 0.0
        %665 = vmatpush2.msra.mxu0 0.0
        %666 = vmatprep.mubr.f32.mxu0 0.0
        %667 = vmatmul.mubr.f32.gmra.mxu0 %v600
        %v668 = vpop.f32.mrf.mxu0
        %v669 = vadd.f32 0.0, %v668
        %v670 = vpop.f32.mrf.mxu0
        %671 = vdwg.mxu0
        %v672 = vadd.f32 %v595, %v669
        %673 = vst.msk [vmem:[#allocation5] sm:$0xff] %vm487, %v672
        %674 = vst.msk [vmem:[#allocation3] sm:$0xff] %vm587, %v569
        %v675 = vld [vmem:[#allocation2] sm:$0xff]
        %677 = vrot.lane.b32.xlu0 %v675, 112
        %v678 = vpop.permute.xlu0 %677
        %679 = vrot.lane.b32.xlu0 %v483, 112
        %v680 = vpop.permute.xlu0 %679
        %v681 = vsel %vm487, %v678, 0
        %v683 = vsel %vm487, %v680, 0
        %685 = vmatprep.subr.mxu0 0.0
        %686 = vmatpush1.xpose.msra.mxu0 0.0
        %687 = vmatprep.subr.mxu0 0.0
        %688 = vmatpush1.xpose.msra.mxu0 0.0
        %689 = vmatprep.subr.mxu0 0.0
        %690 = vmatpush1.xpose.msra.mxu0 0.0
        %691 = vmatprep.subr.mxu0 0.0
        %692 = vmatpush1.xpose.msra.mxu0 0.0
        %693 = vmatprep.subr.mxu0 0.0
        %694 = vmatpush1.xpose.msra.mxu0 0.0
        %695 = vmatprep.subr.mxu0 0.0
        %696 = vmatpush1.xpose.msra.mxu0 0.0
        %697 = vmatprep.subr.mxu0 0.0
        %698 = vmatpush1.xpose.msra.mxu0 0.0
        %699 = vmatprep.subr.mxu0 0.0
        %700 = vmatpush1.xpose.msra.mxu0 0.0
        %701 = vmatprep.subr.mxu0 0.0
        %702 = vmatpush1.xpose.msra.mxu0 0.0
        %703 = vmatprep.subr.mxu0 0.0
        %704 = vmatpush1.xpose.msra.mxu0 0.0
        %705 = vmatprep.subr.mxu0 0.0
        %706 = vmatpush1.xpose.msra.mxu0 0.0
        %707 = vmatprep.subr.mxu0 0.0
        %708 = vmatpush1.xpose.msra.mxu0 0.0
        %709 = vmatprep.subr.mxu0 0.0
        %710 = vmatpush1.xpose.msra.mxu0 0.0
        %711 = vmatprep.subr.mxu0 0.0
        %712 = vmatpush1.xpose.msra.mxu0 0.0
        %713 = vmatprep.subr.mxu0 0.0
        %714 = vmatpush1.xpose.msra.mxu0 0.0
        %715 = vmatprep.subr.mxu0 0.0
        %716 = vmatpush1.xpose.msra.mxu0 %v683
        %717 = vmatprep.subr.mxu0 0.0
        %718 = vmatpush2.xpose.msra.mxu0 0.0
        %719 = vmatprep.subr.mxu0 0.0
        %720 = vmatpush2.xpose.msra.mxu0 0.0
        %721 = vmatprep.subr.mxu0 0.0
        %722 = vmatpush2.xpose.msra.mxu0 0.0
        %723 = vmatprep.subr.mxu0 0.0
        %724 = vmatpush2.xpose.msra.mxu0 0.0
        %725 = vmatprep.subr.mxu0 0.0
        %726 = vmatpush2.xpose.msra.mxu0 0.0
        %727 = vmatprep.subr.mxu0 0.0
        %728 = vmatpush2.xpose.msra.mxu0 0.0
        %729 = vmatprep.subr.mxu0 0.0
        %730 = vmatpush2.xpose.msra.mxu0 0.0
        %731 = vmatprep.subr.mxu0 0.0
        %732 = vmatpush2.xpose.msra.mxu0 0.0
        %733 = vmatprep.subr.mxu0 0.0
        %734 = vmatpush2.xpose.msra.mxu0 0.0
        %735 = vmatprep.subr.mxu0 0.0
        %736 = vmatpush2.xpose.msra.mxu0 0.0
        %737 = vmatprep.subr.mxu0 0.0
        %738 = vmatpush2.xpose.msra.mxu0 0.0
        %739 = vmatprep.subr.mxu0 0.0
        %740 = vmatpush2.xpose.msra.mxu0 0.0
        %741 = vmatprep.subr.mxu0 0.0
        %742 = vmatpush2.xpose.msra.mxu0 0.0
        %743 = vmatprep.subr.mxu0 0.0
        %744 = vmatpush2.xpose.msra.mxu0 0.0
        %745 = vmatprep.subr.mxu0 0.0
        %746 = vmatpush2.xpose.msra.mxu0 0.0
        %747 = vmatprep.subr.mxu0 0.0
        %748 = vmatpush2.xpose.msra.mxu0 0.0
        %749 = vmatprep.mubr.f32.mxu0 0.0
        %750 = vmatmul.mubr.f32.gmra.mxu0 %v681
        %v751 = vpop.f32.mrf.mxu0
        %v752 = vadd.f32 0.0, %v751
        %v753 = vpop.f32.mrf.mxu0
        %754 = vdwg.mxu0
        %s755 = scalar_lea.vmem [#allocation3], 8
        %v756 = vld [vmem:[%s755] sm:$0xff]
        %v757 = vsel %vm565, %v752, -inf
        %758 = vmax.xlane.f32.xlu0 %v757
        %v759 = vpop.xlane.xlu0 %758
        %v760 = vmax.f32 %v756, %v759
        %v761 = vsub.f32 %v756, %v760
        %v762 = vmul.f32 %v761, 1.442695
        %v763 = vpow.pop %v762
        %765 = vset.pattern.permute.xlu0 0
        %766 = vperm.xlu0 %765, %v760
        %v767 = vpop.permute.xlu0 %766
        %v769 = vsub.f32 %v752, %v767
        %v770 = vmul.f32 %v769, 1.442695
        %v771 = vpow.pop %v770
        %s772 = scalar_lea.vmem [#allocation4], 8
        %v773 = vld [vmem:[%s772] sm:$0xff]
        %v774 = vmul.f32 %v763, %v773
        %v775 = vsel %vm565, %v771, 0.0
        %776 = vadd.xlane.f32.xlu0 %v775
        %v777 = vpop.xlane.xlu0 %776
        %v778 = vadd.f32 %v774, %v777
        %779 = vst.msk [vmem:[%s772] sm:$0xff] %vm587, %v778
        %s780 = scalar_lea.vmem [#allocation5], 8
        %v781 = vld [vmem:[%s780] sm:$0xff]
        %783 = vset.pattern.permute.xlu0 0
        %784 = vperm.xlu0 %783, %v763
        %v785 = vpop.permute.xlu0 %784
        %v787 = vmul.f32 %v785, %v781
        %788 = vrot.lane.b32.xlu0 %v483, 48
        %v789 = vpop.permute.xlu0 %788
        %v792 = vsel %vm565, %v771, 0
        %794 = vmatprep.subr.mxu0 0.0
        %795 = vmatpush1.msra.mxu0 0.0
        %796 = vmatprep.subr.mxu0 0.0
        %797 = vmatpush1.msra.mxu0 0.0
        %798 = vmatprep.subr.mxu0 0.0
        %799 = vmatpush1.msra.mxu0 0.0
        %800 = vmatprep.subr.mxu0 0.0
        %801 = vmatpush1.msra.mxu0 0.0
        %802 = vmatprep.subr.mxu0 0.0
        %803 = vmatpush1.msra.mxu0 0.0
        %804 = vmatprep.subr.mxu0 0.0
        %805 = vmatpush1.msra.mxu0 0.0
        %806 = vmatprep.subr.mxu0 0.0
        %807 = vmatpush1.msra.mxu0 0.0
        %808 = vmatprep.subr.mxu0 0.0
        %809 = vmatpush1.msra.mxu0 0.0
        %810 = vmatprep.subr.mxu0 0.0
        %811 = vmatpush1.msra.mxu0 0.0
        %812 = vmatprep.subr.mxu0 0.0
        %813 = vmatpush1.msra.mxu0 0.0
        %814 = vmatprep.subr.mxu0 0.0
        %815 = vmatpush1.msra.mxu0 0.0
        %816 = vmatprep.subr.mxu0 0.0
        %817 = vmatpush1.msra.mxu0 0.0
        %818 = vmatprep.subr.mxu0 0.0
        %819 = vmatpush1.msra.mxu0 0.0
        %820 = vmatprep.subr.mxu0 0.0
        %821 = vmatpush1.msra.mxu0 0.0
        %822 = vmatprep.subr.mxu0 0.0
        %823 = vmatpush1.msra.mxu0 0.0
        %824 = vmatprep.subr.mxu0 0.0
        %825 = vmatpush1.msra.mxu0 %v789
        %826 = vmatprep.subr.mxu0 0.0
        %827 = vmatpush2.msra.mxu0 0.0
        %828 = vmatprep.subr.mxu0 0.0
        %829 = vmatpush2.msra.mxu0 0.0
        %830 = vmatprep.subr.mxu0 0.0
        %831 = vmatpush2.msra.mxu0 0.0
        %832 = vmatprep.subr.mxu0 0.0
        %833 = vmatpush2.msra.mxu0 0.0
        %834 = vmatprep.subr.mxu0 0.0
        %835 = vmatpush2.msra.mxu0 0.0
        %836 = vmatprep.subr.mxu0 0.0
        %837 = vmatpush2.msra.mxu0 0.0
        %838 = vmatprep.subr.mxu0 0.0
        %839 = vmatpush2.msra.mxu0 0.0
        %840 = vmatprep.subr.mxu0 0.0
        %841 = vmatpush2.msra.mxu0 0.0
        %842 = vmatprep.subr.mxu0 0.0
        %843 = vmatpush2.msra.mxu0 0.0
        %844 = vmatprep.subr.mxu0 0.0
        %845 = vmatpush2.msra.mxu0 0.0
        %846 = vmatprep.subr.mxu0 0.0
        %847 = vmatpush2.msra.mxu0 0.0
        %848 = vmatprep.subr.mxu0 0.0
        %849 = vmatpush2.msra.mxu0 0.0
        %850 = vmatprep.subr.mxu0 0.0
        %851 = vmatpush2.msra.mxu0 0.0
        %852 = vmatprep.subr.mxu0 0.0
        %853 = vmatpush2.msra.mxu0 0.0
        %854 = vmatprep.subr.mxu0 0.0
        %855 = vmatpush2.msra.mxu0 0.0
        %856 = vmatprep.subr.mxu0 0.0
        %857 = vmatpush2.msra.mxu0 0.0
        %858 = vmatprep.mubr.f32.mxu0 0.0
        %859 = vmatmul.mubr.f32.gmra.mxu0 %v792
        %v860 = vpop.f32.mrf.mxu0
        %v861 = vadd.f32 0.0, %v860
        %v862 = vpop.f32.mrf.mxu0
        %863 = vdwg.mxu0
        %v864 = vadd.f32 %v787, %v861
        %865 = vst.msk [vmem:[%s780] sm:$0xff] %vm487, %v864
        %866 = vst.msk [vmem:[%s755] sm:$0xff] %vm587, %v760
        %v867 = vld [vmem:[#allocation2] sm:$0xff]
        %869 = vrot.lane.b32.xlu0 %v867, 96
        %v870 = vpop.permute.xlu0 %869
        %871 = vrot.lane.b32.xlu0 %v483, 96
        %v872 = vpop.permute.xlu0 %871
        %v873 = vsel %vm487, %v870, 0
        %v875 = vsel %vm487, %v872, 0
        %877 = vmatprep.subr.mxu0 0.0
        %878 = vmatpush1.xpose.msra.mxu0 0.0
        %879 = vmatprep.subr.mxu0 0.0
        %880 = vmatpush1.xpose.msra.mxu0 0.0
        %881 = vmatprep.subr.mxu0 0.0
        %882 = vmatpush1.xpose.msra.mxu0 0.0
        %883 = vmatprep.subr.mxu0 0.0
        %884 = vmatpush1.xpose.msra.mxu0 0.0
        %885 = vmatprep.subr.mxu0 0.0
        %886 = vmatpush1.xpose.msra.mxu0 0.0
        %887 = vmatprep.subr.mxu0 0.0
        %888 = vmatpush1.xpose.msra.mxu0 0.0
        %889 = vmatprep.subr.mxu0 0.0
        %890 = vmatpush1.xpose.msra.mxu0 0.0
        %891 = vmatprep.subr.mxu0 0.0
        %892 = vmatpush1.xpose.msra.mxu0 0.0
        %893 = vmatprep.subr.mxu0 0.0
        %894 = vmatpush1.xpose.msra.mxu0 0.0
        %895 = vmatprep.subr.mxu0 0.0
        %896 = vmatpush1.xpose.msra.mxu0 0.0
        %897 = vmatprep.subr.mxu0 0.0
        %898 = vmatpush1.xpose.msra.mxu0 0.0
        %899 = vmatprep.subr.mxu0 0.0
        %900 = vmatpush1.xpose.msra.mxu0 0.0
        %901 = vmatprep.subr.mxu0 0.0
        %902 = vmatpush1.xpose.msra.mxu0 0.0
        %903 = vmatprep.subr.mxu0 0.0
        %904 = vmatpush1.xpose.msra.mxu0 0.0
        %905 = vmatprep.subr.mxu0 0.0
        %906 = vmatpush1.xpose.msra.mxu0 0.0
        %907 = vmatprep.subr.mxu0 0.0
        %908 = vmatpush1.xpose.msra.mxu0 %v875
        %909 = vmatprep.subr.mxu0 0.0
        %910 = vmatpush2.xpose.msra.mxu0 0.0
        %911 = vmatprep.subr.mxu0 0.0
        %912 = vmatpush2.xpose.msra.mxu0 0.0
        %913 = vmatprep.subr.mxu0 0.0
        %914 = vmatpush2.xpose.msra.mxu0 0.0
        %915 = vmatprep.subr.mxu0 0.0
        %916 = vmatpush2.xpose.msra.mxu0 0.0
        %917 = vmatprep.subr.mxu0 0.0
        %918 = vmatpush2.xpose.msra.mxu0 0.0
        %919 = vmatprep.subr.mxu0 0.0
        %920 = vmatpush2.xpose.msra.mxu0 0.0
        %921 = vmatprep.subr.mxu0 0.0
        %922 = vmatpush2.xpose.msra.mxu0 0.0
        %923 = vmatprep.subr.mxu0 0.0
        %924 = vmatpush2.xpose.msra.mxu0 0.0
        %925 = vmatprep.subr.mxu0 0.0
        %926 = vmatpush2.xpose.msra.mxu0 0.0
        %927 = vmatprep.subr.mxu0 0.0
        %928 = vmatpush2.xpose.msra.mxu0 0.0
        %929 = vmatprep.subr.mxu0 0.0
        %930 = vmatpush2.xpose.msra.mxu0 0.0
        %931 = vmatprep.subr.mxu0 0.0
        %932 = vmatpush2.xpose.msra.mxu0 0.0
        %933 = vmatprep.subr.mxu0 0.0
        %934 = vmatpush2.xpose.msra.mxu0 0.0
        %935 = vmatprep.subr.mxu0 0.0
        %936 = vmatpush2.xpose.msra.mxu0 0.0
        %937 = vmatprep.subr.mxu0 0.0
        %938 = vmatpush2.xpose.msra.mxu0 0.0
        %939 = vmatprep.subr.mxu0 0.0
        %940 = vmatpush2.xpose.msra.mxu0 0.0
        %941 = vmatprep.mubr.f32.mxu0 0.0
        %942 = vmatmul.mubr.f32.gmra.mxu0 %v873
        %v943 = vpop.f32.mrf.mxu0
        %v944 = vadd.f32 0.0, %v943
        %v945 = vpop.f32.mrf.mxu0
        %946 = vdwg.mxu0
        %s947 = scalar_lea.vmem [#allocation3], 16
        %v948 = vld [vmem:[%s947] sm:$0xff]
        %v949 = vsel %vm565, %v944, -inf
        %950 = vmax.xlane.f32.xlu0 %v949
        %v951 = vpop.xlane.xlu0 %950
        %v952 = vmax.f32 %v948, %v951
        %v953 = vsub.f32 %v948, %v952
        %v954 = vmul.f32 %v953, 1.442695
        %v955 = vpow.pop %v954
        %957 = vset.pattern.permute.xlu0 0
        %958 = vperm.xlu0 %957, %v952
        %v959 = vpop.permute.xlu0 %958
        %v961 = vsub.f32 %v944, %v959
        %v962 = vmul.f32 %v961, 1.442695
        %v963 = vpow.pop %v962
        %s964 = scalar_lea.vmem [#allocation4], 16
        %v965 = vld [vmem:[%s964] sm:$0xff]
        %v966 = vmul.f32 %v955, %v965
        %v967 = vsel %vm565, %v963, 0.0
        %968 = vadd.xlane.f32.xlu0 %v967
        %v969 = vpop.xlane.xlu0 %968
        %v970 = vadd.f32 %v966, %v969
        %971 = vst.msk [vmem:[%s964] sm:$0xff] %vm587, %v970
        %s972 = scalar_lea.vmem [#allocation5], 16
        %v973 = vld [vmem:[%s972] sm:$0xff]
        %975 = vset.pattern.permute.xlu0 0
        %976 = vperm.xlu0 %975, %v955
        %v977 = vpop.permute.xlu0 %976
        %v979 = vmul.f32 %v977, %v973
        %980 = vrot.lane.b32.xlu0 %v483, 32
        %v981 = vpop.permute.xlu0 %980
        %v984 = vsel %vm565, %v963, 0
        %986 = vmatprep.subr.mxu0 0.0
        %987 = vmatpush1.msra.mxu0 0.0
        %988 = vmatprep.subr.mxu0 0.0
        %989 = vmatpush1.msra.mxu0 0.0
        %990 = vmatprep.subr.mxu0 0.0
        %991 = vmatpush1.msra.mxu0 0.0
        %992 = vmatprep.subr.mxu0 0.0
        %993 = vmatpush1.msra.mxu0 0.0
        %994 = vmatprep.subr.mxu0 0.0
        %995 = vmatpush1.msra.mxu0 0.0
        %996 = vmatprep.subr.mxu0 0.0
        %997 = vmatpush1.msra.mxu0 0.0
        %998 = vmatprep.subr.mxu0 0.0
        %999 = vmatpush1.msra.mxu0 0.0
        %1000 = vmatprep.subr.mxu0 0.0
        %1001 = vmatpush1.msra.mxu0 0.0
        %1002 = vmatprep.subr.mxu0 0.0
        %1003 = vmatpush1.msra.mxu0 0.0
        %1004 = vmatprep.subr.mxu0 0.0
        %1005 = vmatpush1.msra.mxu0 0.0
        %1006 = vmatprep.subr.mxu0 0.0
        %1007 = vmatpush1.msra.mxu0 0.0
        %1008 = vmatprep.subr.mxu0 0.0
        %1009 = vmatpush1.msra.mxu0 0.0
        %1010 = vmatprep.subr.mxu0 0.0
        %1011 = vmatpush1.msra.mxu0 0.0
        %1012 = vmatprep.subr.mxu0 0.0
        %1013 = vmatpush1.msra.mxu0 0.0
        %1014 = vmatprep.subr.mxu0 0.0
        %1015 = vmatpush1.msra.mxu0 0.0
        %1016 = vmatprep.subr.mxu0 0.0
        %1017 = vmatpush1.msra.mxu0 %v981
        %1018 = vmatprep.subr.mxu0 0.0
        %1019 = vmatpush2.msra.mxu0 0.0
        %1020 = vmatprep.subr.mxu0 0.0
        %1021 = vmatpush2.msra.mxu0 0.0
        %1022 = vmatprep.subr.mxu0 0.0
        %1023 = vmatpush2.msra.mxu0 0.0
        %1024 = vmatprep.subr.mxu0 0.0
        %1025 = vmatpush2.msra.mxu0 0.0
        %1026 = vmatprep.subr.mxu0 0.0
        %1027 = vmatpush2.msra.mxu0 0.0
        %1028 = vmatprep.subr.mxu0 0.0
        %1029 = vmatpush2.msra.mxu0 0.0
        %1030 = vmatprep.subr.mxu0 0.0
        %1031 = vmatpush2.msra.mxu0 0.0
        %1032 = vmatprep.subr.mxu0 0.0
        %1033 = vmatpush2.msra.mxu0 0.0
        %1034 = vmatprep.subr.mxu0 0.0
        %1035 = vmatpush2.msra.mxu0 0.0
        %1036 = vmatprep.subr.mxu0 0.0
        %1037 = vmatpush2.msra.mxu0 0.0
        %1038 = vmatprep.subr.mxu0 0.0
        %1039 = vmatpush2.msra.mxu0 0.0
        %1040 = vmatprep.subr.mxu0 0.0
        %1041 = vmatpush2.msra.mxu0 0.0
        %1042 = vmatprep.subr.mxu0 0.0
        %1043 = vmatpush2.msra.mxu0 0.0
        %1044 = vmatprep.subr.mxu0 0.0
        %1045 = vmatpush2.msra.mxu0 0.0
        %1046 = vmatprep.subr.mxu0 0.0
        %1047 = vmatpush2.msra.mxu0 0.0
        %1048 = vmatprep.subr.mxu0 0.0
        %1049 = vmatpush2.msra.mxu0 0.0
        %1050 = vmatprep.mubr.f32.mxu0 0.0
        %1051 = vmatmul.mubr.f32.gmra.mxu0 %v984
        %v1052 = vpop.f32.mrf.mxu0
        %v1053 = vadd.f32 0.0, %v1052
        %v1054 = vpop.f32.mrf.mxu0
        %1055 = vdwg.mxu0
        %v1056 = vadd.f32 %v979, %v1053
        %1057 = vst.msk [vmem:[%s972] sm:$0xff] %vm487, %v1056
        %1058 = vst.msk [vmem:[%s947] sm:$0xff] %vm587, %v952
        %v1059 = vld [vmem:[#allocation2] sm:$0xff]
        %1061 = vrot.lane.b32.xlu0 %v1059, 80
        %v1062 = vpop.permute.xlu0 %1061
        %1063 = vrot.lane.b32.xlu0 %v483, 80
        %v1064 = vpop.permute.xlu0 %1063
        %v1065 = vsel %vm487, %v1062, 0
        %v1067 = vsel %vm487, %v1064, 0
        %1069 = vmatprep.subr.mxu0 0.0
        %1070 = vmatpush1.xpose.msra.mxu0 0.0
        %1071 = vmatprep.subr.mxu0 0.0
        %1072 = vmatpush1.xpose.msra.mxu0 0.0
        %1073 = vmatprep.subr.mxu0 0.0
        %1074 = vmatpush1.xpose.msra.mxu0 0.0
        %1075 = vmatprep.subr.mxu0 0.0
        %1076 = vmatpush1.xpose.msra.mxu0 0.0
        %1077 = vmatprep.subr.mxu0 0.0
        %1078 = vmatpush1.xpose.msra.mxu0 0.0
        %1079 = vmatprep.subr.mxu0 0.0
        %1080 = vmatpush1.xpose.msra.mxu0 0.0
        %1081 = vmatprep.subr.mxu0 0.0
        %1082 = vmatpush1.xpose.msra.mxu0 0.0
        %1083 = vmatprep.subr.mxu0 0.0
        %1084 = vmatpush1.xpose.msra.mxu0 0.0
        %1085 = vmatprep.subr.mxu0 0.0
        %1086 = vmatpush1.xpose.msra.mxu0 0.0
        %1087 = vmatprep.subr.mxu0 0.0
        %1088 = vmatpush1.xpose.msra.mxu0 0.0
        %1089 = vmatprep.subr.mxu0 0.0
        %1090 = vmatpush1.xpose.msra.mxu0 0.0
        %1091 = vmatprep.subr.mxu0 0.0
        %1092 = vmatpush1.xpose.msra.mxu0 0.0
        %1093 = vmatprep.subr.mxu0 0.0
        %1094 = vmatpush1.xpose.msra.mxu0 0.0
        %1095 = vmatprep.subr.mxu0 0.0
        %1096 = vmatpush1.xpose.msra.mxu0 0.0
        %1097 = vmatprep.subr.mxu0 0.0
        %1098 = vmatpush1.xpose.msra.mxu0 0.0
        %1099 = vmatprep.subr.mxu0 0.0
        %1100 = vmatpush1.xpose.msra.mxu0 %v1067
        %1101 = vmatprep.subr.mxu0 0.0
        %1102 = vmatpush2.xpose.msra.mxu0 0.0
        %1103 = vmatprep.subr.mxu0 0.0
        %1104 = vmatpush2.xpose.msra.mxu0 0.0
        %1105 = vmatprep.subr.mxu0 0.0
        %1106 = vmatpush2.xpose.msra.mxu0 0.0
        %1107 = vmatprep.subr.mxu0 0.0
        %1108 = vmatpush2.xpose.msra.mxu0 0.0
        %1109 = vmatprep.subr.mxu0 0.0
        %1110 = vmatpush2.xpose.msra.mxu0 0.0
        %1111 = vmatprep.subr.mxu0 0.0
        %1112 = vmatpush2.xpose.msra.mxu0 0.0
        %1113 = vmatprep.subr.mxu0 0.0
        %1114 = vmatpush2.xpose.msra.mxu0 0.0
        %1115 = vmatprep.subr.mxu0 0.0
        %1116 = vmatpush2.xpose.msra.mxu0 0.0
        %1117 = vmatprep.subr.mxu0 0.0
        %1118 = vmatpush2.xpose.msra.mxu0 0.0
        %1119 = vmatprep.subr.mxu0 0.0
        %1120 = vmatpush2.xpose.msra.mxu0 0.0
        %1121 = vmatprep.subr.mxu0 0.0
        %1122 = vmatpush2.xpose.msra.mxu0 0.0
        %1123 = vmatprep.subr.mxu0 0.0
        %1124 = vmatpush2.xpose.msra.mxu0 0.0
        %1125 = vmatprep.subr.mxu0 0.0
        %1126 = vmatpush2.xpose.msra.mxu0 0.0
        %1127 = vmatprep.subr.mxu0 0.0
        %1128 = vmatpush2.xpose.msra.mxu0 0.0
        %1129 = vmatprep.subr.mxu0 0.0
        %1130 = vmatpush2.xpose.msra.mxu0 0.0
        %1131 = vmatprep.subr.mxu0 0.0
        %1132 = vmatpush2.xpose.msra.mxu0 0.0
        %1133 = vmatprep.mubr.f32.mxu0 0.0
        %1134 = vmatmul.mubr.f32.gmra.mxu0 %v1065
        %v1135 = vpop.f32.mrf.mxu0
        %v1136 = vadd.f32 0.0, %v1135
        %v1137 = vpop.f32.mrf.mxu0
        %1138 = vdwg.mxu0
        %s1139 = scalar_lea.vmem [#allocation3], 24
        %v1140 = vld [vmem:[%s1139] sm:$0xff]
        %v1141 = vsel %vm565, %v1136, -inf
        %1142 = vmax.xlane.f32.xlu0 %v1141
        %v1143 = vpop.xlane.xlu0 %1142
        %v1144 = vmax.f32 %v1140, %v1143
        %v1145 = vsub.f32 %v1140, %v1144
        %v1146 = vmul.f32 %v1145, 1.442695
        %v1147 = vpow.pop %v1146
        %1149 = vset.pattern.permute.xlu0 0
        %1150 = vperm.xlu0 %1149, %v1144
        %v1151 = vpop.permute.xlu0 %1150
        %v1153 = vsub.f32 %v1136, %v1151
        %v1154 = vmul.f32 %v1153, 1.442695
        %v1155 = vpow.pop %v1154
        %s1156 = scalar_lea.vmem [#allocation4], 24
        %v1157 = vld [vmem:[%s1156] sm:$0xff]
        %v1158 = vmul.f32 %v1147, %v1157
        %v1159 = vsel %vm565, %v1155, 0.0
        %1160 = vadd.xlane.f32.xlu0 %v1159
        %v1161 = vpop.xlane.xlu0 %1160
        %v1162 = vadd.f32 %v1158, %v1161
        %1163 = vst.msk [vmem:[%s1156] sm:$0xff] %vm587, %v1162
        %s1164 = scalar_lea.vmem [#allocation5], 24
        %v1165 = vld [vmem:[%s1164] sm:$0xff]
        %1167 = vset.pattern.permute.xlu0 0
        %1168 = vperm.xlu0 %1167, %v1147
        %v1169 = vpop.permute.xlu0 %1168
        %v1171 = vmul.f32 %v1169, %v1165
        %1172 = vrot.lane.b32.xlu0 %v483, 16
        %v1173 = vpop.permute.xlu0 %1172
        %v1176 = vsel %vm565, %v1155, 0
        %1178 = vmatprep.subr.mxu0 0.0
        %1179 = vmatpush1.msra.mxu0 0.0
        %1180 = vmatprep.subr.mxu0 0.0
        %1181 = vmatpush1.msra.mxu0 0.0
        %1182 = vmatprep.subr.mxu0 0.0
        %1183 = vmatpush1.msra.mxu0 0.0
        %1184 = vmatprep.subr.mxu0 0.0
        %1185 = vmatpush1.msra.mxu0 0.0
        %1186 = vmatprep.subr.mxu0 0.0
        %1187 = vmatpush1.msra.mxu0 0.0
        %1188 = vmatprep.subr.mxu0 0.0
        %1189 = vmatpush1.msra.mxu0 0.0
        %1190 = vmatprep.subr.mxu0 0.0
        %1191 = vmatpush1.msra.mxu0 0.0
        %1192 = vmatprep.subr.mxu0 0.0
        %1193 = vmatpush1.msra.mxu0 0.0
        %1194 = vmatprep.subr.mxu0 0.0
        %1195 = vmatpush1.msra.mxu0 0.0
        %1196 = vmatprep.subr.mxu0 0.0
        %1197 = vmatpush1.msra.mxu0 0.0
        %1198 = vmatprep.subr.mxu0 0.0
        %1199 = vmatpush1.msra.mxu0 0.0
        %1200 = vmatprep.subr.mxu0 0.0
        %1201 = vmatpush1.msra.mxu0 0.0
        %1202 = vmatprep.subr.mxu0 0.0
        %1203 = vmatpush1.msra.mxu0 0.0
        %1204 = vmatprep.subr.mxu0 0.0
        %1205 = vmatpush1.msra.mxu0 0.0
        %1206 = vmatprep.subr.mxu0 0.0
        %1207 = vmatpush1.msra.mxu0 0.0
        %1208 = vmatprep.subr.mxu0 0.0
        %1209 = vmatpush1.msra.mxu0 %v1173
        %1210 = vmatprep.subr.mxu0 0.0
        %1211 = vmatpush2.msra.mxu0 0.0
        %1212 = vmatprep.subr.mxu0 0.0
        %1213 = vmatpush2.msra.mxu0 0.0
        %1214 = vmatprep.subr.mxu0 0.0
        %1215 = vmatpush2.msra.mxu0 0.0
        %1216 = vmatprep.subr.mxu0 0.0
        %1217 = vmatpush2.msra.mxu0 0.0
        %1218 = vmatprep.subr.mxu0 0.0
        %1219 = vmatpush2.msra.mxu0 0.0
        %1220 = vmatprep.subr.mxu0 0.0
        %1221 = vmatpush2.msra.mxu0 0.0
        %1222 = vmatprep.subr.mxu0 0.0
        %1223 = vmatpush2.msra.mxu0 0.0
        %1224 = vmatprep.subr.mxu0 0.0
        %1225 = vmatpush2.msra.mxu0 0.0
        %1226 = vmatprep.subr.mxu0 0.0
        %1227 = vmatpush2.msra.mxu0 0.0
        %1228 = vmatprep.subr.mxu0 0.0
        %1229 = vmatpush2.msra.mxu0 0.0
        %1230 = vmatprep.subr.mxu0 0.0
        %1231 = vmatpush2.msra.mxu0 0.0
        %1232 = vmatprep.subr.mxu0 0.0
        %1233 = vmatpush2.msra.mxu0 0.0
        %1234 = vmatprep.subr.mxu0 0.0
        %1235 = vmatpush2.msra.mxu0 0.0
        %1236 = vmatprep.subr.mxu0 0.0
        %1237 = vmatpush2.msra.mxu0 0.0
        %1238 = vmatprep.subr.mxu0 0.0
        %1239 = vmatpush2.msra.mxu0 0.0
        %1240 = vmatprep.subr.mxu0 0.0
        %1241 = vmatpush2.msra.mxu0 0.0
        %1242 = vmatprep.mubr.f32.mxu0 0.0
        %1243 = vmatmul.mubr.f32.gmra.mxu0 %v1176
        %v1244 = vpop.f32.mrf.mxu0
        %v1245 = vadd.f32 0.0, %v1244
        %v1246 = vpop.f32.mrf.mxu0
        %1247 = vdwg.mxu0
        %v1248 = vadd.f32 %v1171, %v1245
        %1249 = vst.msk [vmem:[%s1164] sm:$0xff] %vm487, %v1248
        %1250 = vst.msk [vmem:[%s1139] sm:$0xff] %vm587, %v1144
        // Predicated region
        $region49: #{tpu_custom_call.1} parent=43 // pred_check
          %p1251 = pneg %p307
        $region50: #{tpu_custom_call.1} parent=43 // pred_check_branch
          %1253 = sbr.rel (%p1251) target = $region52
        $region51: #{tpu_custom_call.1} parent=43 // pred_region
          %v1254 = vld [vmem:[#allocation4] sm:$0xff]
          %v1255 = vrcp.pop %v1254
          %v1256 = vld [vmem:[#allocation5] sm:$0xff]
          %1258 = vset.pattern.permute.xlu0 0
          %1259 = vperm.xlu0 %1258, %v1255
          %v1260 = vpop.permute.xlu0 %1259
          %v1262 = vmul.f32 %v1256, %v1260
          %v1263 = vld [vmem:[%s4] sm:$0xff]
          %v1264 = vld [vmem:[%s4 + $0x8] sm:$0xff]
          %v1265 = vld [vmem:[%s772] sm:$0xff]
          %v1266 = vrcp.pop %v1265
          %v1267 = vld [vmem:[%s780] sm:$0xff]
          %1269 = vset.pattern.permute.xlu0 0
          %1270 = vperm.xlu0 %1269, %v1266
          %v1271 = vpop.permute.xlu0 %1270
          %v1273 = vmul.f32 %v1267, %v1271
          %v1274 = vld [vmem:[%s4 + $0x10] sm:$0xff]
          %v1275 = vld [vmem:[%s4 + $0x18] sm:$0xff]
          %v1277 = vsel %vm487, %v1273, 0
          %1279 = vmatprep.subr.mxu0 0.0
          %1280 = vmatpush1.msra.mxu0 0.0
          %1281 = vmatprep.subr.mxu0 0.0
          %1282 = vmatpush1.msra.mxu0 0.0
          %1283 = vmatprep.subr.mxu0 0.0
          %1284 = vmatpush1.msra.mxu0 0.0
          %1285 = vmatprep.subr.mxu0 0.0
          %1286 = vmatpush1.msra.mxu0 0.0
          %1287 = vmatprep.subr.mxu0 0.0
          %1288 = vmatpush1.msra.mxu0 0.0
          %1289 = vmatprep.subr.mxu0 0.0
          %1290 = vmatpush1.msra.mxu0 0.0
          %1291 = vmatprep.subr.mxu0 0.0
          %1292 = vmatpush1.msra.mxu0 0.0
          %1293 = vmatprep.subr.mxu0 0.0
          %1294 = vmatpush1.msra.mxu0 0.0
          %1295 = vmatprep.subr.mxu0 0.0
          %1296 = vmatpush1.msra.mxu0 0.0
          %1297 = vmatprep.subr.mxu0 0.0
          %1298 = vmatpush1.msra.mxu0 0.0
          %1299 = vmatprep.subr.mxu0 0.0
          %1300 = vmatpush1.msra.mxu0 0.0
          %1301 = vmatprep.subr.mxu0 0.0
          %1302 = vmatpush1.msra.mxu0 0.0
          %1303 = vmatprep.subr.mxu0 0.0
          %1304 = vmatpush1.msra.mxu0 0.0
          %1305 = vmatprep.subr.mxu0 0.0
          %1306 = vmatpush1.msra.mxu0 0.0
          %1307 = vmatprep.subr.mxu0 0.0
          %1308 = vmatpush1.msra.mxu0 %v1275
          %1309 = vmatprep.subr.mxu0 0.0
          %1310 = vmatpush1.msra.mxu0 %v1274
          %1311 = vmatprep.subr.mxu0 0.0
          %1312 = vmatpush2.msra.mxu0 0.0
          %1313 = vmatprep.subr.mxu0 0.0
          %1314 = vmatpush2.msra.mxu0 0.0
          %1315 = vmatprep.subr.mxu0 0.0
          %1316 = vmatpush2.msra.mxu0 0.0
          %1317 = vmatprep.subr.mxu0 0.0
          %1318 = vmatpush2.msra.mxu0 0.0
          %1319 = vmatprep.subr.mxu0 0.0
          %1320 = vmatpush2.msra.mxu0 0.0
          %1321 = vmatprep.subr.mxu0 0.0
          %1322 = vmatpush2.msra.mxu0 0.0
          %1323 = vmatprep.subr.mxu0 0.0
          %1324 = vmatpush2.msra.mxu0 0.0
          %1325 = vmatprep.subr.mxu0 0.0
          %1326 = vmatpush2.msra.mxu0 0.0
          %1327 = vmatprep.subr.mxu0 0.0
          %1328 = vmatpush2.msra.mxu0 0.0
          %1329 = vmatprep.subr.mxu0 0.0
          %1330 = vmatpush2.msra.mxu0 0.0
          %1331 = vmatprep.subr.mxu0 0.0
          %1332 = vmatpush2.msra.mxu0 0.0
          %1333 = vmatprep.subr.mxu0 0.0
          %1334 = vmatpush2.msra.mxu0 0.0
          %1335 = vmatprep.subr.mxu0 0.0
          %1336 = vmatpush2.msra.mxu0 0.0
          %1337 = vmatprep.subr.mxu0 0.0
          %1338 = vmatpush2.msra.mxu0 0.0
          %1339 = vmatprep.subr.mxu0 0.0
          %1340 = vmatpush2.msra.mxu0 0.0
          %1341 = vmatprep.subr.mxu0 0.0
          %1342 = vmatpush2.msra.mxu0 0.0
          %1343 = vmatprep.mubr.f32.mxu0 0.0
          %1344 = vmatmul.mubr.f32.gmra.mxu0 %v1277
          %v1345 = vpop.f32.mrf.mxu0
          %v1346 = vadd.f32 0.0, %v1345
          %v1347 = vpop.f32.mrf.mxu0
          %1348 = vdwg.mxu0
          %v1350 = vsel %vm487, %v1262, 0
          %1352 = vmatprep.subr.mxu0 0.0
          %1353 = vmatpush1.msra.mxu0 0.0
          %1354 = vmatprep.subr.mxu0 0.0
          %1355 = vmatpush1.msra.mxu0 0.0
          %1356 = vmatprep.subr.mxu0 0.0
          %1357 = vmatpush1.msra.mxu0 0.0
          %1358 = vmatprep.subr.mxu0 0.0
          %1359 = vmatpush1.msra.mxu0 0.0
          %1360 = vmatprep.subr.mxu0 0.0
          %1361 = vmatpush1.msra.mxu0 0.0
          %1362 = vmatprep.subr.mxu0 0.0
          %1363 = vmatpush1.msra.mxu0 0.0
          %1364 = vmatprep.subr.mxu0 0.0
          %1365 = vmatpush1.msra.mxu0 0.0
          %1366 = vmatprep.subr.mxu0 0.0
          %1367 = vmatpush1.msra.mxu0 0.0
          %1368 = vmatprep.subr.mxu0 0.0
          %1369 = vmatpush1.msra.mxu0 0.0
          %1370 = vmatprep.subr.mxu0 0.0
          %1371 = vmatpush1.msra.mxu0 0.0
          %1372 = vmatprep.subr.mxu0 0.0
          %1373 = vmatpush1.msra.mxu0 0.0
          %1374 = vmatprep.subr.mxu0 0.0
          %1375 = vmatpush1.msra.mxu0 0.0
          %1376 = vmatprep.subr.mxu0 0.0
          %1377 = vmatpush1.msra.mxu0 0.0
          %1378 = vmatprep.subr.mxu0 0.0
          %1379 = vmatpush1.msra.mxu0 0.0
          %1380 = vmatprep.subr.mxu0 0.0
          %1381 = vmatpush1.msra.mxu0 %v1264
          %1382 = vmatprep.subr.mxu0 0.0
          %1383 = vmatpush1.msra.mxu0 %v1263
          %1384 = vmatprep.subr.mxu0 0.0
          %1385 = vmatpush2.msra.mxu0 0.0
          %1386 = vmatprep.subr.mxu0 0.0
          %1387 = vmatpush2.msra.mxu0 0.0
          %1388 = vmatprep.subr.mxu0 0.0
          %1389 = vmatpush2.msra.mxu0 0.0
          %1390 = vmatprep.subr.mxu0 0.0
          %1391 = vmatpush2.msra.mxu0 0.0
          %1392 = vmatprep.subr.mxu0 0.0
          %1393 = vmatpush2.msra.mxu0 0.0
          %1394 = vmatprep.subr.mxu0 0.0
          %1395 = vmatpush2.msra.mxu0 0.0
          %1396 = vmatprep.subr.mxu0 0.0
          %1397 = vmatpush2.msra.mxu0 0.0
          %1398 = vmatprep.subr.mxu0 0.0
          %1399 = vmatpush2.msra.mxu0 0.0
          %1400 = vmatprep.subr.mxu0 0.0
          %1401 = vmatpush2.msra.mxu0 0.0
          %1402 = vmatprep.subr.mxu0 0.0
          %1403 = vmatpush2.msra.mxu0 0.0
          %1404 = vmatprep.subr.mxu0 0.0
          %1405 = vmatpush2.msra.mxu0 0.0
          %1406 = vmatprep.subr.mxu0 0.0
          %1407 = vmatpush2.msra.mxu0 0.0
          %1408 = vmatprep.subr.mxu0 0.0
          %1409 = vmatpush2.msra.mxu0 0.0
          %1410 = vmatprep.subr.mxu0 0.0
          %1411 = vmatpush2.msra.mxu0 0.0
          %1412 = vmatprep.subr.mxu0 0.0
          %1413 = vmatpush2.msra.mxu0 0.0
          %1414 = vmatprep.subr.mxu0 0.0
          %1415 = vmatpush2.msra.mxu0 0.0
          %1416 = vmatprep.mubr.f32.mxu0 0.0
          %1417 = vmatmul.mubr.f32.gmra.mxu0 %v1350
          %v1418 = vpop.f32.mrf.mxu0
          %v1419 = vadd.f32 %v1346, %v1418
          %v1420 = vpop.f32.mrf.mxu0
          %1421 = vdwg.mxu0
          %v1422 = vld [vmem:[%s964] sm:$0xff]
          %v1423 = vrcp.pop %v1422
          %v1424 = vld [vmem:[%s972] sm:$0xff]
          %1426 = vset.pattern.permute.xlu0 0
          %1427 = vperm.xlu0 %1426, %v1423
          %v1428 = vpop.permute.xlu0 %1427
          %v1430 = vmul.f32 %v1424, %v1428
          %v1431 = vld [vmem:[%s4 + $0x20] sm:$0xff]
          %v1432 = vld [vmem:[%s4 + $0x28] sm:$0xff]
          %v1434 = vsel %vm487, %v1430, 0
          %1436 = vmatprep.subr.mxu0 0.0
          %1437 = vmatpush1.msra.mxu0 0.0
          %1438 = vmatprep.subr.mxu0 0.0
          %1439 = vmatpush1.msra.mxu0 0.0
          %1440 = vmatprep.subr.mxu0 0.0
          %1441 = vmatpush1.msra.mxu0 0.0
          %1442 = vmatprep.subr.mxu0 0.0
          %1443 = vmatpush1.msra.mxu0 0.0
          %1444 = vmatprep.subr.mxu0 0.0
          %1445 = vmatpush1.msra.mxu0 0.0
          %1446 = vmatprep.subr.mxu0 0.0
          %1447 = vmatpush1.msra.mxu0 0.0
          %1448 = vmatprep.subr.mxu0 0.0
          %1449 = vmatpush1.msra.mxu0 0.0
          %1450 = vmatprep.subr.mxu0 0.0
          %1451 = vmatpush1.msra.mxu0 0.0
          %1452 = vmatprep.subr.mxu0 0.0
          %1453 = vmatpush1.msra.mxu0 0.0
          %1454 = vmatprep.subr.mxu0 0.0
          %1455 = vmatpush1.msra.mxu0 0.0
          %1456 = vmatprep.subr.mxu0 0.0
          %1457 = vmatpush1.msra.mxu0 0.0
          %1458 = vmatprep.subr.mxu0 0.0
          %1459 = vmatpush1.msra.mxu0 0.0
          %1460 = vmatprep.subr.mxu0 0.0
          %1461 = vmatpush1.msra.mxu0 0.0
          %1462 = vmatprep.subr.mxu0 0.0
          %1463 = vmatpush1.msra.mxu0 0.0
          %1464 = vmatprep.subr.mxu0 0.0
          %1465 = vmatpush1.msra.mxu0 %v1432
          %1466 = vmatprep.subr.mxu0 0.0
          %1467 = vmatpush1.msra.mxu0 %v1431
          %1468 = vmatprep.subr.mxu0 0.0
          %1469 = vmatpush2.msra.mxu0 0.0
          %1470 = vmatprep.subr.mxu0 0.0
          %1471 = vmatpush2.msra.mxu0 0.0
          %1472 = vmatprep.subr.mxu0 0.0
          %1473 = vmatpush2.msra.mxu0 0.0
          %1474 = vmatprep.subr.mxu0 0.0
          %1475 = vmatpush2.msra.mxu0 0.0
          %1476 = vmatprep.subr.mxu0 0.0
          %1477 = vmatpush2.msra.mxu0 0.0
          %1478 = vmatprep.subr.mxu0 0.0
          %1479 = vmatpush2.msra.mxu0 0.0
          %1480 = vmatprep.subr.mxu0 0.0
          %1481 = vmatpush2.msra.mxu0 0.0
          %1482 = vmatprep.subr.mxu0 0.0
          %1483 = vmatpush2.msra.mxu0 0.0
          %1484 = vmatprep.subr.mxu0 0.0
          %1485 = vmatpush2.msra.mxu0 0.0
          %1486 = vmatprep.subr.mxu0 0.0
          %1487 = vmatpush2.msra.mxu0 0.0
          %1488 = vmatprep.subr.mxu0 0.0
          %1489 = vmatpush2.msra.mxu0 0.0
          %1490 = vmatprep.subr.mxu0 0.0
          %1491 = vmatpush2.msra.mxu0 0.0
          %1492 = vmatprep.subr.mxu0 0.0
          %1493 = vmatpush2.msra.mxu0 0.0
          %1494 = vmatprep.subr.mxu0 0.0
          %1495 = vmatpush2.msra.mxu0 0.0
          %1496 = vmatprep.subr.mxu0 0.0
          %1497 = vmatpush2.msra.mxu0 0.0
          %1498 = vmatprep.subr.mxu0 0.0
          %1499 = vmatpush2.msra.mxu0 0.0
          %1500 = vmatprep.mubr.f32.mxu0 0.0
          %1501 = vmatmul.mubr.f32.gmra.mxu0 %v1434
          %v1502 = vpop.f32.mrf.mxu0
          %v1503 = vadd.f32 0.0, %v1502
          %v1504 = vpop.f32.mrf.mxu0
          %1505 = vdwg.mxu0
          %v1506 = vadd.f32 %v1419, %v1503
          %v1507 = vld [vmem:[%s1156] sm:$0xff]
          %v1508 = vrcp.pop %v1507
          %v1509 = vld [vmem:[%s1164] sm:$0xff]
          %1511 = vset.pattern.permute.xlu0 0
          %1512 = vperm.xlu0 %1511, %v1508
          %v1513 = vpop.permute.xlu0 %1512
          %v1515 = vmul.f32 %v1509, %v1513
          %v1516 = vld [vmem:[%s4 + $0x30] sm:$0xff]
          %v1517 = vld [vmem:[%s4 + $0x38] sm:$0xff]
          %v1519 = vsel %vm487, %v1515, 0
          %1521 = vmatprep.subr.mxu0 0.0
          %1522 = vmatpush1.msra.mxu0 0.0
          %1523 = vmatprep.subr.mxu0 0.0
          %1524 = vmatpush1.msra.mxu0 0.0
          %1525 = vmatprep.subr.mxu0 0.0
          %1526 = vmatpush1.msra.mxu0 0.0
          %1527 = vmatprep.subr.mxu0 0.0
          %1528 = vmatpush1.msra.mxu0 0.0
          %1529 = vmatprep.subr.mxu0 0.0
          %1530 = vmatpush1.msra.mxu0 0.0
          %1531 = vmatprep.subr.mxu0 0.0
          %1532 = vmatpush1.msra.mxu0 0.0
          %1533 = vmatprep.subr.mxu0 0.0
          %1534 = vmatpush1.msra.mxu0 0.0
          %1535 = vmatprep.subr.mxu0 0.0
          %1536 = vmatpush1.msra.mxu0 0.0
          %1537 = vmatprep.subr.mxu0 0.0
          %1538 = vmatpush1.msra.mxu0 0.0
          %1539 = vmatprep.subr.mxu0 0.0
          %1540 = vmatpush1.msra.mxu0 0.0
          %1541 = vmatprep.subr.mxu0 0.0
          %1542 = vmatpush1.msra.mxu0 0.0
          %1543 = vmatprep.subr.mxu0 0.0
          %1544 = vmatpush1.msra.mxu0 0.0
          %1545 = vmatprep.subr.mxu0 0.0
          %1546 = vmatpush1.msra.mxu0 0.0
          %1547 = vmatprep.subr.mxu0 0.0
          %1548 = vmatpush1.msra.mxu0 0.0
          %1549 = vmatprep.subr.mxu0 0.0
          %1550 = vmatpush1.msra.mxu0 %v1517
          %1551 = vmatprep.subr.mxu0 0.0
          %1552 = vmatpush1.msra.mxu0 %v1516
          %1553 = vmatprep.subr.mxu0 0.0
          %1554 = vmatpush2.msra.mxu0 0.0
          %1555 = vmatprep.subr.mxu0 0.0
          %1556 = vmatpush2.msra.mxu0 0.0
          %1557 = vmatprep.subr.mxu0 0.0
          %1558 = vmatpush2.msra.mxu0 0.0
          %1559 = vmatprep.subr.mxu0 0.0
          %1560 = vmatpush2.msra.mxu0 0.0
          %1561 = vmatprep.subr.mxu0 0.0
          %1562 = vmatpush2.msra.mxu0 0.0
          %1563 = vmatprep.subr.mxu0 0.0
          %1564 = vmatpush2.msra.mxu0 0.0
          %1565 = vmatprep.subr.mxu0 0.0
          %1566 = vmatpush2.msra.mxu0 0.0
          %1567 = vmatprep.subr.mxu0 0.0
          %1568 = vmatpush2.msra.mxu0 0.0
          %1569 = vmatprep.subr.mxu0 0.0
          %1570 = vmatpush2.msra.mxu0 0.0
          %1571 = vmatprep.subr.mxu0 0.0
          %1572 = vmatpush2.msra.mxu0 0.0
          %1573 = vmatprep.subr.mxu0 0.0
          %1574 = vmatpush2.msra.mxu0 0.0
          %1575 = vmatprep.subr.mxu0 0.0
          %1576 = vmatpush2.msra.mxu0 0.0
          %1577 = vmatprep.subr.mxu0 0.0
          %1578 = vmatpush2.msra.mxu0 0.0
          %1579 = vmatprep.subr.mxu0 0.0
          %1580 = vmatpush2.msra.mxu0 0.0
          %1581 = vmatprep.subr.mxu0 0.0
          %1582 = vmatpush2.msra.mxu0 0.0
          %1583 = vmatprep.subr.mxu0 0.0
          %1584 = vmatpush2.msra.mxu0 0.0
          %1585 = vmatprep.mubr.f32.mxu0 0.0
          %1586 = vmatmul.mubr.f32.gmra.mxu0 %v1519
          %v1587 = vpop.f32.mrf.mxu0
          %v1588 = vadd.f32 0.0, %v1587
          %v1589 = vpop.f32.mrf.mxu0
          %1590 = vdwg.mxu0
          %v1591 = vadd.f32 %v1506, %v1588
          %v1592 = vld [vmem:[%s5] sm:$0x1]
          %v1594 = vlaneseq
          %v1595 = vshrl.u32 %v1594, 7
          %v1596 = vsub.s32 0, %v1595
          %v1597 = vrot.slane %v1592, %v1596
          %v1599 = vadd.f32 %v1591, %v1597
          %1600 = vst.msk [vmem:[%s292] sm:$0xff] %vm412, %v1599
        $region52: #{tpu_custom_call.1} parent=43 // pred_fallthru
          _
        %s1601 = sand.u32 %s189, 1
        %s1602 = scalar_lea.sflag [#allocation7], %s1601
        %s1603 = sand.u32 %s189, 1
        %s1604 = smul.addr %s1603, 8
        %s1605 = scalar_lea.vmem [#allocation6], %s1604
        // Predicated region
        $region53: #{tpu_custom_call.1} parent=43 // pred_check
          %p1606 = pneg %p199
        $region54: #{tpu_custom_call.1} parent=43 // pred_check_branch
          %1608 = sbr.rel (%p1606) target = $region56
        $region55: #{tpu_custom_call.1} parent=43 // pred_region
          %s1610 = ssub.s32 128, 128
          %1611 = vsyncadd %s1602, %s1610
          %s1612 = sadd.s32 %s26, %s25
          %s1613 = smul.addr %s1612, 128
          %s1614 = scalar_lea.hbm %s6, %s1613
          %s1616 = sshll.u32 %s1605, 4
          %s1617 = int_to_ptr.vmem [resolvable:$true] %s1616
          %1619 = dma.vmem_to_hbm [thread:$0]  %s1617, 128, %s1614, %s1602
        $region56: #{tpu_custom_call.1} parent=43 // pred_fallthru
          _
      $region44: #{tpu_custom_call.1} parent=5 // pred_fallthru
        _
      %p1620 = scmp.le.s32.totalorder 2, %s15
      // Predicated region
      $region57: #{tpu_custom_call.1} parent=5 // pred_check
        %p1621 = pneg %p1620
      $region58: #{tpu_custom_call.1} parent=5 // pred_check_branch
        %1623 = sbr.rel (%p1621) target = $region60
      $region59: #{tpu_custom_call.1} parent=5 // pred_region
        %s1624 = ssub.s32 %s15, 2
        // Predicated region
        $region61: #{tpu_custom_call.1} parent=59 // pred_check
          %p1625 = pneg %p205
        $region62: #{tpu_custom_call.1} parent=59 // pred_check_branch
          %1627 = sbr.rel (%p1625) target = $region64
        $region63: #{tpu_custom_call.1} parent=59 // pred_region
          %s1628 = sand.u32 %s190, 1
          %s1629 = scalar_lea.sflag [#allocation7], %s1628
          %s1630 = sand.u32 %s190, 1
          %s1631 = smul.addr %s1630, 8
          %s1632 = scalar_lea.vmem [#allocation6], %s1631
          %1633 = dma.done %s1629, 128
        $region64: #{tpu_custom_call.1} parent=59 // pred_fallthru
          _
      $region60: #{tpu_custom_call.1} parent=5 // pred_fallthru
        _
    $region6: #{tpu_custom_call.1} parent=1 // loop_footer
      %s19 = sadd.s32 1, %s15
    $region7: #{tpu_custom_call.1} parent=1 // loop_footer_branch
      %14 = sbr.rel target = $region3
    $region8: #{tpu_custom_call.1} parent=1 // loop_exit
      _
    %1634 = vsyncpa [#allocation7], 1
    %s1635 = scalar_lea.sflag [#allocation7], 1
    %1636 = vsyncpa %s1635, 1

</llo_original>
